<compile_context>
chip_gen: v6e
topology: v6e:2x2x1
jax: 0.10.0
libtpu: 0.0.40
codegen_flags: <defaults>
</compile_context>

<pallas_src>
import math
import functools
import numpy as np
import jax
import jax.numpy as jnp
from jax import lax
from jax.experimental import pallas as pl
from jax.experimental.pallas import tpu as pltpu


_BIG = 1e30  # z-buffer sentinel for "no face hit"


def _round_up(x, m):
    return ((x + m - 1) // m) * m


# ----------------------------------------------------------------------------
# Camera glue (pytorch3d look_at_view_transform + FoVPerspectiveCameras math)
# ----------------------------------------------------------------------------
def look_at_view_transform_jax(dist, elev, azim):
    """pytorch3d.look_at_view_transform with degrees=False, at=origin, up=+Y."""
    elev = jnp.asarray(elev, jnp.float32).reshape(-1)
    azim = jnp.asarray(azim, jnp.float32).reshape(-1)
    x = dist * jnp.cos(elev) * jnp.sin(azim)
    y = dist * jnp.sin(elev)
    z = dist * jnp.cos(elev) * jnp.cos(azim)
    C = jnp.stack([x, y, z], axis=-1)                              # camera position (N, 3)
    up = jnp.broadcast_to(jnp.array([0.0, 1.0, 0.0], jnp.float32), C.shape)

    def _norm(v):
        return v / jnp.maximum(jnp.linalg.norm(v, axis=-1, keepdims=True), 1e-8)

    z_axis = _norm(-C)                                             # look at origin
    x_axis = _norm(jnp.cross(up, z_axis))
    y_axis = _norm(jnp.cross(z_axis, x_axis))
    R = jnp.stack([x_axis, y_axis, z_axis], axis=1)                # rows = camera axes
    R = jnp.transpose(R, (0, 2, 1))                                # pytorch3d: columns = axes
    T = -jnp.einsum("bji,bj->bi", R, C)                            # T = -R^T C
    return R, T


def full_world_to_ndc_matrix(R, T, fov_deg, znear, zfar):
    """Row-vector 4x4: clip = [x y z 1] @ M.  w-component of clip == view-space z."""
    B = R.shape[0]
    Wv = jnp.zeros((B, 4, 4), jnp.float32)
    Wv = Wv.at[:, :3, :3].set(R)
    Wv = Wv.at[:, 3, :3].set(T)
    Wv = Wv.at[:, 3, 3].set(1.0)
    fov = fov_deg * math.pi / 180.0
    s = 1.0 / math.tan(fov / 2.0)
    f, n = float(zfar), float(znear)
    P = jnp.array(
        [[s, 0.0, 0.0, 0.0],
         [0.0, s, 0.0, 0.0],
         [0.0, 0.0, f / (f - n), 1.0],
         [0.0, 0.0, -f * n / (f - n), 0.0]], jnp.float32)
    return jnp.einsum("bij,jk->bik", Wv, P)                        # (B, 4, 4)


# ----------------------------------------------------------------------------
# Pallas kernel 1: vertex projection (world -> NDC + view depth), lane-dense V
# ----------------------------------------------------------------------------
def _transform_kernel(mat_ref, verts_ref, out_ref):
    # mat_ref: (B, 16) f32 in SMEM (flattened row-vector 4x4 per batch)
    # verts_ref block: (1, 3, Vp)  rows = x, y, z   (V on the 128-lane axis)
    # out_ref   block: (1, 4, Vp)  rows = x_ndc, y_ndc, z_view, z_ndc
    b = pl.program_id(0)
    v = verts_ref[0]                                               # (3, Vp)
    x = v[0:1, :]
    y = v[1:2, :]
    z = v[2:3, :]

    def clip_col(c):
        # clip[:, c] = x*M[0,c] + y*M[1,c] + z*M[2,c] + M[3,c]   (scalars from SMEM)
        return (x * mat_ref[b, 0 + c] + y * mat_ref[b, 4 + c]
                + z * mat_ref[b, 8 + c] + mat_ref[b, 12 + c])

    cx = clip_col(0)
    cy = clip_col(1)
    cz = clip_col(2)
    w = clip_col(3)                                                # view-space z
    w_safe = jnp.where(jnp.abs(w) < 1e-8, jnp.float32(1e-8), w)
    inv_w = 1.0 / w_safe
    out_ref[0] = jnp.concatenate([cx * inv_w, cy * inv_w, w, cz * inv_w], axis=0)


def transform_verts_pallas(verts, M):
    B, V, _ = verts.shape
    Vp = _round_up(max(V, 1), 128)                                 # lane-dense / aligned
    verts_t = jnp.transpose(verts.astype(jnp.float32), (0, 2, 1))  # (B, 3, V)
    if Vp != V:
        verts_t = jnp.pad(verts_t, ((0, 0), (0, 0), (0, Vp - V)))
    m_flat = M.astype(jnp.float32).reshape(B, 16)
    out = pl.pallas_call(
        _transform_kernel,
        out_shape=jax.ShapeDtypeStruct((B, 4, Vp), jnp.float32),
        grid=(B,),
        in_specs=[pl.BlockSpec(memory_space=pltpu.MemorySpace.SMEM),
                  pl.BlockSpec((1, 3, Vp), lambda b: (b, 0, 0))],
        out_specs=pl.BlockSpec((1, 4, Vp), lambda b: (b, 0, 0)),
        compiler_params=pltpu.CompilerParams(dimension_semantics=("parallel",)),
    )(m_flat, verts_t)
    return out                                                     # (B, 4, Vp)


# ----------------------------------------------------------------------------
# Pallas kernel 2: tiled mesh rasterizer (faces_per_pixel = 1, blur_radius = 0)
# ----------------------------------------------------------------------------
def _make_raster_kernel(img_h):
    def kernel(fv_ref, zbuf_ref):
        # fv_ref block:   (1, 9, TF)  rows = x0,y0,z0, x1,y1,z1, x2,y2,z2 (faces on lanes)
        # zbuf_ref block: (1, TH, W)  -- resident min-accumulator across the face axis
        th = zbuf_ref.shape[1]
        w = zbuf_ref.shape[2]
        f_idx = pl.program_id(2)

        @pl.when(f_idx == 0)
        def _init():
            zbuf_ref[...] = jnp.full(zbuf_ref.shape, _BIG, dtype=jnp.float32)

        # --- per-face prework, all (1, 1, TF): amortized over TH*W pixels ---
        x0 = fv_ref[:, 0:1, :]; y0 = fv_ref[:, 1:2, :]; z0 = fv_ref[:, 2:3, :]
        x1 = fv_ref[:, 3:4, :]; y1 = fv_ref[:, 4:5, :]; z1 = fv_ref[:, 5:6, :]
        x2 = fv_ref[:, 6:7, :]; y2 = fv_ref[:, 7:8, :]; z2 = fv_ref[:, 8:9, :]

        area = (x1 - x0) * (y2 - y0) - (x2 - x0) * (y1 - y0)       # signed twice-area
        abs_area = jnp.abs(area)
        valid = abs_area > 1e-9                                    # degenerate / padding faces out
        s = jnp.where(area >= 0.0, jnp.float32(1.0), jnp.float32(-1.0))

        # edge e_i(px, py) = A_i*py - B_i*px + C_i, pre-multiplied by sign(area) so that
        # "inside" <=> min(e0, e1, e2) >= 0.  Invalid faces get C = -BIG (never inside).
        a0 = (x2 - x1) * s; b0 = (y2 - y1) * s
        a1 = (x0 - x2) * s; b1 = (y0 - y2) * s
        a2 = (x1 - x0) * s; b2 = (y1 - y0) * s
        c0 = b0 * x1 - a0 * y1
        c1 = b1 * x2 - a1 * y2
        c2 = b2 * x0 - a2 * y0
        neg_big = jnp.float32(-_BIG)
        c0m = jnp.where(valid, c0, neg_big)
        c1m = jnp.where(valid, c1, neg_big)
        c2m = jnp.where(valid, c2, neg_big)

        k0 = z1 * z2
        k1 = z0 * z2
        k2 = z0 * z1
        num = z0 * k0 * abs_area                                   # z0*z1*z2*|area|

        # combined affine coefficients so that zden = e0*k0 + e1*k1 + e2*k2
        # costs a single full-size op:  zden = (az*py + cz) - bz*px
        az = a0 * k0 + a1 * k1 + a2 * k2
        bz = b0 * k0 + b1 * k1 + b2 * k2
        cz = c0 * k0 + c1 * k1 + c2 * k2

        # --- pixel centers (pytorch3d NDC: +X left, +Y up, pixel (0,0) top-left) ---
        row0 = pl.program_id(1) * th
        yi = row0 + lax.broadcasted_iota(jnp.int32, (th, 1, 1), 0)
        py = 1.0 - (2.0 * yi.astype(jnp.float32) + 1.0) / jnp.float32(img_h)   # (TH, 1, 1)
        xi = lax.broadcasted_iota(jnp.int32, (1, w, 1), 1)
        px = 1.0 - (2.0 * xi.astype(jnp.float32) + 1.0) / jnp.float32(w)       # (1, W, 1)

        # --- edge functions: only the final subtraction is at full (TH, W, TF) size ---
        e0 = (a0 * py + c0m) - (b0 * px)
        e1 = (a1 * py + c1m) - (b1 * px)
        e2 = (a2 * py + c2m) - (b2 * px)
        emin = jnp.minimum(e0, jnp.minimum(e1, e2))                # inside <=> emin >= 0

        # perspective-correct view-space depth without per-pixel barycentric divides:
        #   zp = z0*z1*z2*|area| / (e0*z1z2 + e1*z0z2 + e2*z0z1)
        zden = (az * py + cz) - (bz * px)                          # one full-size op
        zden = jnp.where(zden >= 0.0, jnp.maximum(zden, 1e-10),
                         jnp.minimum(zden, -1e-10))                # sign-preserving clamp
        zp = num * pl.reciprocal(zden, approx=True)

        # keep pixel iff inside AND depth in front of the camera (zp >= 0)
        keep = jnp.minimum(emin, zp) >= 0.0
        # TODO(synk): pytorch3d additionally clips against znear/zfar; not replicated here.

        cand = jnp.where(keep, zp, jnp.float32(_BIG))
        zmin = jnp.min(cand, axis=-1)                              # (TH, W) lane-axis reduce (XLU)
        zbuf_ref[0] = jnp.minimum(zbuf_ref[0], zmin)               # single accumulator store

        @pl.when(f_idx == pl.num_programs(2) - 1)
        def _finalize():
            zb = zbuf_ref[0]
            zbuf_ref[0] = jnp.where(zb >= jnp.float32(1e29), jnp.float32(-1.0), zb)

    return kernel


def _raster_config(H, F):
    """Per-generation row/face tile sizes and scoped-VMEM limit.

    Each full-size temporary in the kernel is (TH, W, TF) f32; keep it in the
    1-4 MiB range so the handful of live temporaries comfortably fits VMEM.
    """
    try:
        kind = jax.devices()[0].device_kind.lower()
    except Exception:
        kind = ""
    if "v6" in kind:                       # 128 MiB VMEM
        th_pref, tf_pref, vmem = 16, 512, 96 * 1024 * 1024
    elif "v5" in kind:                     # 128 MiB physical, tight scoped default
        th_pref, tf_pref, vmem = 16, 512, 80 * 1024 * 1024
    else:                                  # v7x (64 MiB VMEM) and unknown: conservative
        th_pref, tf_pref, vmem = 8, 256, 48 * 1024 * 1024
    th = H
    for cand in (th_pref, 16, 8):
        if cand <= H and H % cand == 0:
            th = cand
            break
    fp0 = _round_up(max(F, 1), 128)
    tf = min(tf_pref, fp0)
    fp = _round_up(max(F, 1), tf)
    return th, tf, fp, vmem


def rasterize_pallas(face_pts, img_size):
    # face_pts: (B, 9, F) float32; rows = x0,y0,z0,x1,y1,z1,x2,y2,z2 of (x_ndc, y_ndc, z_view)
    face_pts = face_pts.astype(jnp.float32)
    B, _, F = face_pts.shape
    H = W = int(img_size)
    th, tf, Fp, vmem_bytes = _raster_config(H, F)
    if Fp != F:
        # pad with all-zero (degenerate, area=0) faces -> masked out in-kernel
        face_pts = jnp.pad(face_pts, ((0, 0), (0, 0), (0, Fp - F)))
    n_h = H // th
    n_f = Fp // tf

    cost = pl.CostEstimate(
        flops=int(18 * B * H * W * Fp),
        transcendentals=int(B * H * W * Fp),
        bytes_accessed=int(B * (n_h * 9 * Fp * 4 + H * W * 4)),
    )
    return pl.pallas_call(
        _make_raster_kernel(H),
        out_shape=jax.ShapeDtypeStruct((B, H, W), jnp.float32),
        grid=(B, n_h, n_f),
        in_specs=[pl.BlockSpec((1, 9, tf), lambda b, h, f: (b, 0, f))],
        out_specs=pl.BlockSpec((1, th, W), lambda b, h, f: (b, h, 0)),
        compiler_params=pltpu.CompilerParams(
            dimension_semantics=("parallel", "parallel", "arbitrary"),
            vmem_limit_bytes=vmem_bytes),
        cost_estimate=cost,
    )(face_pts)


# ----------------------------------------------------------------------------
# DepthRendder.forward
# ----------------------------------------------------------------------------
def depth_renderer_forward(verts, faces, pitch=None, yaw=None, img_size=128):
    B, V, _ = verts.shape

    if pitch is not None and yaw is not None:
        elev = jnp.float32(math.pi / 2) - pitch.reshape(-1).astype(jnp.float32)
        azim = jnp.float32(math.pi / 2) - yaw.reshape(-1).astype(jnp.float32)
    else:
        elev = jnp.zeros((1,), jnp.float32)
        azim = jnp.zeros((1,), jnp.float32)

    R, T = look_at_view_transform_jax(1.0, elev, azim)
    if R.shape[0] == 1 and B > 1:
        R = jnp.broadcast_to(R, (B, 3, 3))
        T = jnp.broadcast_to(T, (B, 3))
    M = full_world_to_ndc_matrix(R, T, fov_deg=12.0, znear=0.88, zfar=1.12)

    # --- vertex projection (Pallas, lane-dense) ---
    proj = transform_verts_pallas(verts, M)                        # (B, 4, Vp)
    x_ndc = proj[:, 0, :V]
    y_ndc = proj[:, 1, :V]
    z_view = proj[:, 2, :V]
    z_ndc = proj[:, 3, :V]
    verts_ndc = jnp.stack([x_ndc, y_ndc, z_ndc], axis=-1)          # (B, V, 3)

    # gather per-face vertex data (plain-JAX glue): (B, 9, F)
    pts = jnp.stack([x_ndc, y_ndc, z_view], axis=1)                # (B, 3, V)
    g = pts[:, :, faces]                                           # (B, 3, F, 3)
    F = faces.shape[0]
    face_pts = jnp.transpose(g, (0, 3, 1, 2)).reshape(B, 9, F)     # rows x0,y0,z0,x1,...

    # --- rasterization (Pallas, tiled over batch / rows / faces) ---
    zbuf = rasterize_pallas(face_pts, img_size)                    # (B, H, W)
    depth_maps = zbuf[..., None]                                   # (B, H, W, 1) like fragments.zbuf

    masks = depth_maps >= 0
    # torch: depth_maps[bg] = depth_maps[masks].median()  (global lower-median over batch)
    # TODO(synk): torch.median over a boolean-masked selection has no direct Pallas
    # equivalent; computed with a sort in plain JAX (and guarded for empty foreground).
    flat = depth_maps.reshape(-1)
    valid = flat >= 0
    n_valid = jnp.sum(valid.astype(jnp.int32))
    sorted_vals = jnp.sort(jnp.where(valid, flat, jnp.inf))
    med_idx = jnp.maximum((n_valid - 1) // 2, 0)
    median = jnp.where(n_valid > 0, sorted_vals[med_idx], jnp.float32(-1.0))
    depth_maps = jnp.where(masks, depth_maps, median)

    return depth_maps, masks, verts_ndc


# ----------------------------------------------------------------------------
# Example run
# ----------------------------------------------------------------------------
if __name__ == "__main__":
    B = 2
    nx = ny = 4
    V = nx * ny                     # 16 vertices
    img_size = 16

    # deterministic small mesh: a 4x4 grid plane around the origin (fits the 12-deg FoV)
    xs = jnp.linspace(-0.06, 0.06, nx)
    ys = jnp.linspace(-0.06, 0.06, ny)
    gx, gy = jnp.meshgrid(xs, ys, indexing="xy")
    base_xy = jnp.stack([gx.ravel(), gy.ravel()], axis=-1)         # (V, 2)

    key = jax.random.PRNGKey(0)
    kz, kp, kyw = jax.random.split(key, 3)
    z_off = 0.02 * jax.random.normal(kz, (B, V))
    verts = jnp.concatenate(
        [jnp.broadcast_to(base_xy, (B, V, 2)), z_off[..., None]], axis=-1
    ).astype(jnp.float32)                                          # (B, V, 3)

    faces_list = []
    for j in range(ny - 1):
        for i in range(nx - 1):
            v00 = j * nx + i
            v01 = v00 + 1
            v10 = v00 + nx
            v11 = v10 + 1
            faces_list.append([v00, v10, v01])
            faces_list.append([v01, v10, v11])
    faces = jnp.array(faces_list, dtype=jnp.int32)                 # (18, 3)

    pitch = (math.pi / 2 + 0.05 * jax.random.normal(kp, (B, 1))).astype(jnp.float32)
    yaw = (math.pi / 2 + 0.05 * jax.random.normal(kyw, (B, 1))).astype(jnp.float32)

    forward = jax.jit(depth_renderer_forward, static_argnames=("img_size",))
    depth_maps, masks, verts_ndc = forward(
        verts, faces, pitch=pitch, yaw=yaw, img_size=img_size)

    jax.block_until_ready(depth_maps)
    jax.block_until_ready(masks)
    jax.block_until_ready(verts_ndc)

    assert depth_maps.shape == (B, img_size, img_size, 1)
    assert masks.shape == (B, img_size, img_size, 1)
    assert verts_ndc.shape == (B, V, 3)
    assert bool(jnp.all(jnp.isfinite(depth_maps)))
    print("KERNEL_OK")
</pallas_src>

<mosaic_0001>
module attributes {stable_mosaic.version = 11 : i64} {
  func.func @_transform_kernel(%arg0: i32, %arg1: memref<2x16xf32, #tpu.memory_space<smem>>, %arg2: memref<1x3x128xf32, #tpu.memory_space<vmem>>, %arg3: memref<1x4x128xf32, #tpu.memory_space<vmem>>) attributes {dimension_semantics = [#tpu.dimension_semantics<parallel>], iteration_bounds = array<i64: 2>, scalar_prefetch = 0 : i64, scratch_operands = 0 : i64, tpu.core_type = #tpu.core_type<tc>, window_params = [{transform_indices = @transform_0, window_bounds = array<i64: 2, 16>}, {transform_indices = @transform_1, window_bounds = array<i64: 1, 3, 128>}, {transform_indices = @transform_2, window_bounds = array<i64: 1, 4, 128>}]} {
    %c0 = arith.constant 0 : index
    %c0_0 = arith.constant 0 : index
    %c0_1 = arith.constant 0 : index
    %0 = vector.load %arg2[%c0, %c0_0, %c0_1] : memref<1x3x128xf32, #tpu.memory_space<vmem>>, vector<1x3x128xf32>
    %1 = vector.shape_cast %0 : vector<1x3x128xf32> to vector<3x128xf32>
    %2 = vector.extract_strided_slice %1 {offsets = [0, 0], sizes = [1, 128], strides = [1, 1]} : vector<3x128xf32> to vector<1x128xf32>
    %3 = vector.extract_strided_slice %1 {offsets = [1, 0], sizes = [1, 128], strides = [1, 1]} : vector<3x128xf32> to vector<1x128xf32>
    %4 = vector.extract_strided_slice %1 {offsets = [2, 0], sizes = [1, 128], strides = [1, 1]} : vector<3x128xf32> to vector<1x128xf32>
    %5 = arith.index_cast %arg0 : i32 to index
    %c0_2 = arith.constant 0 : index
    %6 = memref.load %arg1[%5, %c0_2] : memref<2x16xf32, #tpu.memory_space<smem>>
    %7 = vector.broadcast %6 : f32 to vector<1x128xf32>
    %8 = arith.mulf %2, %7 : vector<1x128xf32>
    %9 = arith.index_cast %arg0 : i32 to index
    %c4 = arith.constant 4 : index
    %10 = memref.load %arg1[%9, %c4] : memref<2x16xf32, #tpu.memory_space<smem>>
    %11 = vector.broadcast %10 : f32 to vector<1x128xf32>
    %12 = arith.mulf %3, %11 : vector<1x128xf32>
    %13 = arith.addf %8, %12 : vector<1x128xf32>
    %14 = arith.index_cast %arg0 : i32 to index
    %c8 = arith.constant 8 : index
    %15 = memref.load %arg1[%14, %c8] : memref<2x16xf32, #tpu.memory_space<smem>>
    %16 = vector.broadcast %15 : f32 to vector<1x128xf32>
    %17 = arith.mulf %4, %16 : vector<1x128xf32>
    %18 = arith.addf %13, %17 : vector<1x128xf32>
    %19 = arith.index_cast %arg0 : i32 to index
    %c12 = arith.constant 12 : index
    %20 = memref.load %arg1[%19, %c12] : memref<2x16xf32, #tpu.memory_space<smem>>
    %21 = vector.broadcast %20 : f32 to vector<1x128xf32>
    %22 = arith.addf %18, %21 : vector<1x128xf32>
    %23 = arith.index_cast %arg0 : i32 to index
    %c1 = arith.constant 1 : index
    %24 = memref.load %arg1[%23, %c1] : memref<2x16xf32, #tpu.memory_space<smem>>
    %25 = vector.broadcast %24 : f32 to vector<1x128xf32>
    %26 = arith.mulf %2, %25 : vector<1x128xf32>
    %27 = arith.index_cast %arg0 : i32 to index
    %c5 = arith.constant 5 : index
    %28 = memref.load %arg1[%27, %c5] : memref<2x16xf32, #tpu.memory_space<smem>>
    %29 = vector.broadcast %28 : f32 to vector<1x128xf32>
    %30 = arith.mulf %3, %29 : vector<1x128xf32>
    %31 = arith.addf %26, %30 : vector<1x128xf32>
    %32 = arith.index_cast %arg0 : i32 to index
    %c9 = arith.constant 9 : index
    %33 = memref.load %arg1[%32, %c9] : memref<2x16xf32, #tpu.memory_space<smem>>
    %34 = vector.broadcast %33 : f32 to vector<1x128xf32>
    %35 = arith.mulf %4, %34 : vector<1x128xf32>
    %36 = arith.addf %31, %35 : vector<1x128xf32>
    %37 = arith.index_cast %arg0 : i32 to index
    %c13 = arith.constant 13 : index
    %38 = memref.load %arg1[%37, %c13] : memref<2x16xf32, #tpu.memory_space<smem>>
    %39 = vector.broadcast %38 : f32 to vector<1x128xf32>
    %40 = arith.addf %36, %39 : vector<1x128xf32>
    %41 = arith.index_cast %arg0 : i32 to index
    %c2 = arith.constant 2 : index
    %42 = memref.load %arg1[%41, %c2] : memref<2x16xf32, #tpu.memory_space<smem>>
    %43 = vector.broadcast %42 : f32 to vector<1x128xf32>
    %44 = arith.mulf %2, %43 : vector<1x128xf32>
    %45 = arith.index_cast %arg0 : i32 to index
    %c6 = arith.constant 6 : index
    %46 = memref.load %arg1[%45, %c6] : memref<2x16xf32, #tpu.memory_space<smem>>
    %47 = vector.broadcast %46 : f32 to vector<1x128xf32>
    %48 = arith.mulf %3, %47 : vector<1x128xf32>
    %49 = arith.addf %44, %48 : vector<1x128xf32>
    %50 = arith.index_cast %arg0 : i32 to index
    %c10 = arith.constant 10 : index
    %51 = memref.load %arg1[%50, %c10] : memref<2x16xf32, #tpu.memory_space<smem>>
    %52 = vector.broadcast %51 : f32 to vector<1x128xf32>
    %53 = arith.mulf %4, %52 : vector<1x128xf32>
    %54 = arith.addf %49, %53 : vector<1x128xf32>
    %55 = arith.index_cast %arg0 : i32 to index
    %c14 = arith.constant 14 : index
    %56 = memref.load %arg1[%55, %c14] : memref<2x16xf32, #tpu.memory_space<smem>>
    %57 = vector.broadcast %56 : f32 to vector<1x128xf32>
    %58 = arith.addf %54, %57 : vector<1x128xf32>
    %59 = arith.index_cast %arg0 : i32 to index
    %c3 = arith.constant 3 : index
    %60 = memref.load %arg1[%59, %c3] : memref<2x16xf32, #tpu.memory_space<smem>>
    %61 = vector.broadcast %60 : f32 to vector<1x128xf32>
    %62 = arith.mulf %2, %61 : vector<1x128xf32>
    %63 = arith.index_cast %arg0 : i32 to index
    %c7 = arith.constant 7 : index
    %64 = memref.load %arg1[%63, %c7] : memref<2x16xf32, #tpu.memory_space<smem>>
    %65 = vector.broadcast %64 : f32 to vector<1x128xf32>
    %66 = arith.mulf %3, %65 : vector<1x128xf32>
    %67 = arith.addf %62, %66 : vector<1x128xf32>
    %68 = arith.index_cast %arg0 : i32 to index
    %c11 = arith.constant 11 : index
    %69 = memref.load %arg1[%68, %c11] : memref<2x16xf32, #tpu.memory_space<smem>>
    %70 = vector.broadcast %69 : f32 to vector<1x128xf32>
    %71 = arith.mulf %4, %70 : vector<1x128xf32>
    %72 = arith.addf %67, %71 : vector<1x128xf32>
    %73 = arith.index_cast %arg0 : i32 to index
    %c15 = arith.constant 15 : index
    %74 = memref.load %arg1[%73, %c15] : memref<2x16xf32, #tpu.memory_space<smem>>
    %75 = vector.broadcast %74 : f32 to vector<1x128xf32>
    %76 = arith.addf %72, %75 : vector<1x128xf32>
    %77 = math.absf %76 : vector<1x128xf32>
    %cst = arith.constant 9.99999993E-9 : f32
    %78 = vector.broadcast %cst : f32 to vector<1x128xf32>
    %79 = arith.cmpf olt, %77, %78 : vector<1x128xf32>
    %cst_3 = arith.constant 9.99999993E-9 : f32
    %80 = vector.broadcast %cst_3 : f32 to vector<1x128xf32>
    %81 = arith.select %79, %80, %76 : vector<1x128xi1>, vector<1x128xf32>
    %cst_4 = arith.constant 1.000000e+00 : f32
    %82 = vector.broadcast %cst_4 : f32 to vector<1x128xf32>
    %83 = arith.divf %82, %81 : vector<1x128xf32>
    %84 = arith.mulf %22, %83 : vector<1x128xf32>
    %85 = arith.mulf %40, %83 : vector<1x128xf32>
    %86 = arith.mulf %58, %83 : vector<1x128xf32>
    %87 = tpu.concatenate %84, %85, %76, %86 in 0 : vector<1x128xf32>, vector<1x128xf32>, vector<1x128xf32>, vector<1x128xf32> -> vector<4x128xf32>
    %c0_5 = arith.constant 0 : index
    %c0_6 = arith.constant 0 : index
    %c0_7 = arith.constant 0 : index
    %88 = vector.load %arg3[%c0_5, %c0_6, %c0_7] : memref<1x4x128xf32, #tpu.memory_space<vmem>>, vector<1x4x128xf32>
    %89 = vector.shape_cast %88 : vector<1x4x128xf32> to vector<4x128xf32>
    %90 = vector.shape_cast %87 : vector<4x128xf32> to vector<1x4x128xf32>
    tpu.vector_store %arg3[%c0_5, %c0_6, %c0_7], %90 {strides = array<i32>} : memref<1x4x128xf32, #tpu.memory_space<vmem>>, vector<1x4x128xf32>,
    return
  }
  func.func @transform_0(%arg0: i32) -> (i32, i32) {
    %c0_i32 = arith.constant 0 : i32
    %c0_i32_0 = arith.constant 0 : i32
    %c0_i32_1 = arith.constant 0 : i32
    return %c0_i32, %c0_i32_0 : i32, i32
  }
  func.func @transform_1(%arg0: i32) -> (i32, i32, i32) {
    %c0_i32 = arith.constant 0 : i32
    %c0_i32_0 = arith.constant 0 : i32
    %c0_i32_1 = arith.constant 0 : i32
    return %arg0, %c0_i32, %c0_i32_0 : i32, i32, i32
  }
  func.func @transform_2(%arg0: i32) -> (i32, i32, i32) {
    %c0_i32 = arith.constant 0 : i32
    %c0_i32_0 = arith.constant 0 : i32
    %c0_i32_1 = arith.constant 0 : i32
    return %arg0, %c0_i32, %c0_i32_0 : i32, i32, i32
  }
}

module attributes {stable_mosaic.version = 11 : i64} {
  func.func @kernel(%arg0: i32, %arg1: i32, %arg2: i32, %arg3: memref<1x9x128xf32, #tpu.memory_space<vmem>>, %arg4: memref<1x8x16xf32, #tpu.memory_space<vmem>>) attributes {dimension_semantics = [#tpu.dimension_semantics<parallel>, #tpu.dimension_semantics<parallel>, #tpu.dimension_semantics<arbitrary>], iteration_bounds = array<i64: 2, 2, 1>, scalar_prefetch = 0 : i64, scratch_operands = 0 : i64, tpu.core_type = #tpu.core_type<tc>, window_params = [{transform_indices = @transform_0, window_bounds = array<i64: 1, 9, 128>}, {transform_indices = @transform_1, window_bounds = array<i64: 1, 8, 16>}]} {
    %c0_i32 = arith.constant 0 : i32
    %0 = arith.cmpi eq, %arg2, %c0_i32 : i32
    %1 = arith.extui %0 : i1 to i32
    %c0_i32_0 = arith.constant 0 : i32
    %2 = arith.cmpi ne, %1, %c0_i32_0 : i32
    scf.if %2 {
      %cst_47 = arith.constant 1.000000e+30 : f32
      %168 = vector.broadcast %cst_47 : f32 to vector<1x8x16xf32>
      %c0_48 = arith.constant 0 : index
      %c0_49 = arith.constant 0 : index
      %c0_50 = arith.constant 0 : index
      %169 = vector.load %arg4[%c0_48, %c0_49, %c0_50] : memref<1x8x16xf32, #tpu.memory_space<vmem>>, vector<1x8x16xf32>
      tpu.vector_store %arg4[%c0_48, %c0_49, %c0_50], %168 {strides = array<i32>} : memref<1x8x16xf32, #tpu.memory_space<vmem>>, vector<1x8x16xf32>,
    } else {
    }
    %c0 = arith.constant 0 : index
    %c0_1 = arith.constant 0 : index
    %c0_2 = arith.constant 0 : index
    %3 = vector.load %arg3[%c0, %c0_1, %c0_2] : memref<1x9x128xf32, #tpu.memory_space<vmem>>, vector<1x1x128xf32>
    %c0_3 = arith.constant 0 : index
    %c1 = arith.constant 1 : index
    %c0_4 = arith.constant 0 : index
    %4 = vector.load %arg3[%c0_3, %c1, %c0_4] : memref<1x9x128xf32, #tpu.memory_space<vmem>>, vector<1x1x128xf32>
    %c0_5 = arith.constant 0 : index
    %c2 = arith.constant 2 : index
    %c0_6 = arith.constant 0 : index
    %5 = vector.load %arg3[%c0_5, %c2, %c0_6] : memref<1x9x128xf32, #tpu.memory_space<vmem>>, vector<1x1x128xf32>
    %c0_7 = arith.constant 0 : index
    %c3 = arith.constant 3 : index
    %c0_8 = arith.constant 0 : index
    %6 = vector.load %arg3[%c0_7, %c3, %c0_8] : memref<1x9x128xf32, #tpu.memory_space<vmem>>, vector<1x1x128xf32>
    %c0_9 = arith.constant 0 : index
    %c4 = arith.constant 4 : index
    %c0_10 = arith.constant 0 : index
    %7 = vector.load %arg3[%c0_9, %c4, %c0_10] : memref<1x9x128xf32, #tpu.memory_space<vmem>>, vector<1x1x128xf32>
    %c0_11 = arith.constant 0 : index
    %c5 = arith.constant 5 : index
    %c0_12 = arith.constant 0 : index
    %8 = vector.load %arg3[%c0_11, %c5, %c0_12] : memref<1x9x128xf32, #tpu.memory_space<vmem>>, vector<1x1x128xf32>
    %c0_13 = arith.constant 0 : index
    %c6 = arith.constant 6 : index
    %c0_14 = arith.constant 0 : index
    %9 = vector.load %arg3[%c0_13, %c6, %c0_14] : memref<1x9x128xf32, #tpu.memory_space<vmem>>, vector<1x1x128xf32>
    %c0_15 = arith.constant 0 : index
    %c7 = arith.constant 7 : index
    %c0_16 = arith.constant 0 : index
    %10 = vector.load %arg3[%c0_15, %c7, %c0_16] : memref<1x9x128xf32, #tpu.memory_space<vmem>>, vector<1x1x128xf32>
    %c0_17 = arith.constant 0 : index
    %c8 = arith.constant 8 : index
    %c0_18 = arith.constant 0 : index
    %11 = vector.load %arg3[%c0_17, %c8, %c0_18] : memref<1x9x128xf32, #tpu.memory_space<vmem>>, vector<1x1x128xf32>
    %12 = arith.subf %6, %3 : vector<1x1x128xf32>
    %13 = arith.subf %10, %4 : vector<1x1x128xf32>
    %14 = arith.mulf %12, %13 : vector<1x1x128xf32>
    %15 = arith.subf %9, %3 : vector<1x1x128xf32>
    %16 = arith.subf %7, %4 : vector<1x1x128xf32>
    %17 = arith.mulf %15, %16 : vector<1x1x128xf32>
    %18 = arith.subf %14, %17 : vector<1x1x128xf32>
    %19 = math.absf %18 : vector<1x1x128xf32>
    %cst = arith.constant 9.99999971E-10 : f32
    %20 = vector.broadcast %cst : f32 to vector<1x1x128xf32>
    %21 = arith.cmpf ogt, %19, %20 : vector<1x1x128xf32>
    %cst_19 = arith.constant 0.000000e+00 : f32
    %22 = vector.broadcast %cst_19 : f32 to vector<1x1x128xf32>
    %23 = arith.cmpf oge, %18, %22 : vector<1x1x128xf32>
    %cst_20 = arith.constant 1.000000e+00 : f32
    %cst_21 = arith.constant -1.000000e+00 : f32
    %24 = vector.broadcast %cst_20 : f32 to vector<1x1x128xf32>
    %25 = vector.broadcast %cst_21 : f32 to vector<1x1x128xf32>
    %26 = arith.select %23, %24, %25 : vector<1x1x128xi1>, vector<1x1x128xf32>
    %27 = arith.subf %9, %6 : vector<1x1x128xf32>
    %28 = arith.mulf %27, %26 : vector<1x1x128xf32>
    %29 = arith.subf %10, %7 : vector<1x1x128xf32>
    %30 = arith.mulf %29, %26 : vector<1x1x128xf32>
    %31 = arith.subf %3, %9 : vector<1x1x128xf32>
    %32 = arith.mulf %31, %26 : vector<1x1x128xf32>
    %33 = arith.subf %4, %10 : vector<1x1x128xf32>
    %34 = arith.mulf %33, %26 : vector<1x1x128xf32>
    %35 = arith.subf %6, %3 : vector<1x1x128xf32>
    %36 = arith.mulf %35, %26 : vector<1x1x128xf32>
    %37 = arith.subf %7, %4 : vector<1x1x128xf32>
    %38 = arith.mulf %37, %26 : vector<1x1x128xf32>
    %39 = arith.mulf %30, %6 : vector<1x1x128xf32>
    %40 = arith.mulf %28, %7 : vector<1x1x128xf32>
    %41 = arith.subf %39, %40 : vector<1x1x128xf32>
    %42 = arith.mulf %34, %9 : vector<1x1x128xf32>
    %43 = arith.mulf %32, %10 : vector<1x1x128xf32>
    %44 = arith.subf %42, %43 : vector<1x1x128xf32>
    %45 = arith.mulf %38, %3 : vector<1x1x128xf32>
    %46 = arith.mulf %36, %4 : vector<1x1x128xf32>
    %47 = arith.subf %45, %46 : vector<1x1x128xf32>
    %cst_22 = arith.constant -1.000000e+30 : f32
    %48 = vector.broadcast %cst_22 : f32 to vector<1x1x128xf32>
    %49 = arith.select %21, %41, %48 : vector<1x1x128xi1>, vector<1x1x128xf32>
    %cst_23 = arith.constant -1.000000e+30 : f32
    %50 = vector.broadcast %cst_23 : f32 to vector<1x1x128xf32>
    %51 = arith.select %21, %44, %50 : vector<1x1x128xi1>, vector<1x1x128xf32>
    %cst_24 = arith.constant -1.000000e+30 : f32
    %52 = vector.broadcast %cst_24 : f32 to vector<1x1x128xf32>
    %53 = arith.select %21, %47, %52 : vector<1x1x128xi1>, vector<1x1x128xf32>
    %54 = arith.mulf %8, %11 : vector<1x1x128xf32>
    %55 = arith.mulf %5, %11 : vector<1x1x128xf32>
    %56 = arith.mulf %5, %8 : vector<1x1x128xf32>
    %57 = arith.mulf %5, %54 : vector<1x1x128xf32>
    %58 = arith.mulf %57, %19 : vector<1x1x128xf32>
    %59 = arith.mulf %28, %54 : vector<1x1x128xf32>
    %60 = arith.mulf %32, %55 : vector<1x1x128xf32>
    %61 = arith.addf %59, %60 : vector<1x1x128xf32>
    %62 = arith.mulf %36, %56 : vector<1x1x128xf32>
    %63 = arith.addf %61, %62 : vector<1x1x128xf32>
    %64 = arith.mulf %30, %54 : vector<1x1x128xf32>
    %65 = arith.mulf %34, %55 : vector<1x1x128xf32>
    %66 = arith.addf %64, %65 : vector<1x1x128xf32>
    %67 = arith.mulf %38, %56 : vector<1x1x128xf32>
    %68 = arith.addf %66, %67 : vector<1x1x128xf32>
    %69 = arith.mulf %41, %54 : vector<1x1x128xf32>
    %70 = arith.mulf %44, %55 : vector<1x1x128xf32>
    %71 = arith.addf %69, %70 : vector<1x1x128xf32>
    %72 = arith.mulf %47, %56 : vector<1x1x128xf32>
    %73 = arith.addf %71, %72 : vector<1x1x128xf32>
    %c8_i32 = arith.constant 8 : i32
    %74 = arith.muli %arg1, %c8_i32 : i32
    %75 = tpu.iota {dimensions = array<i32: 0>} : vector<8x1x1xi32>
    %76 = vector.broadcast %74 : i32 to vector<8x1x1xi32>
    %77 = arith.addi %76, %75 : vector<8x1x1xi32>
    %78 = arith.sitofp %77 : vector<8x1x1xi32> to vector<8x1x1xf32>
    %cst_25 = arith.constant 2.000000e+00 : f32
    %79 = vector.broadcast %cst_25 : f32 to vector<8x1x1xf32>
    %80 = arith.mulf %79, %78 : vector<8x1x1xf32>
    %cst_26 = arith.constant 1.000000e+00 : f32
    %81 = vector.broadcast %cst_26 : f32 to vector<8x1x1xf32>
    %82 = arith.addf %80, %81 : vector<8x1x1xf32>
    %cst_27 = arith.constant 1.600000e+01 : f32
    %83 = vector.broadcast %cst_27 : f32 to vector<8x1x1xf32>
    %84 = arith.divf %82, %83 : vector<8x1x1xf32>
    %cst_28 = arith.constant 1.000000e+00 : f32
    %85 = vector.broadcast %cst_28 : f32 to vector<8x1x1xf32>
    %86 = arith.subf %85, %84 : vector<8x1x1xf32>
    %87 = tpu.iota {dimensions = array<i32: 1>} : vector<1x16x1xi32>
    %88 = arith.sitofp %87 : vector<1x16x1xi32> to vector<1x16x1xf32>
    %cst_29 = arith.constant 2.000000e+00 : f32
    %89 = vector.broadcast %cst_29 : f32 to vector<1x16x1xf32>
    %90 = arith.mulf %89, %88 : vector<1x16x1xf32>
    %cst_30 = arith.constant 1.000000e+00 : f32
    %91 = vector.broadcast %cst_30 : f32 to vector<1x16x1xf32>
    %92 = arith.addf %90, %91 : vector<1x16x1xf32>
    %cst_31 = arith.constant 1.600000e+01 : f32
    %93 = vector.broadcast %cst_31 : f32 to vector<1x16x1xf32>
    %94 = arith.divf %92, %93 : vector<1x16x1xf32>
    %cst_32 = arith.constant 1.000000e+00 : f32
    %95 = vector.broadcast %cst_32 : f32 to vector<1x16x1xf32>
    %96 = arith.subf %95, %94 : vector<1x16x1xf32>
    %97 = vector.broadcast %28 : vector<1x1x128xf32> to vector<8x1x128xf32>
    %98 = vector.broadcast %86 : vector<8x1x1xf32> to vector<8x1x128xf32>
    %99 = arith.mulf %97, %98 : vector<8x1x128xf32>
    %100 = vector.broadcast %49 : vector<1x1x128xf32> to vector<8x1x128xf32>
    %101 = arith.addf %99, %100 : vector<8x1x128xf32>
    %102 = vector.broadcast %30 : vector<1x1x128xf32> to vector<1x16x128xf32>
    %103 = vector.broadcast %96 : vector<1x16x1xf32> to vector<1x16x128xf32>
    %104 = arith.mulf %102, %103 : vector<1x16x128xf32>
    %105 = vector.broadcast %101 : vector<8x1x128xf32> to vector<8x16x128xf32>
    %106 = vector.broadcast %104 : vector<1x16x128xf32> to vector<8x16x128xf32>
    %107 = arith.subf %105, %106 : vector<8x16x128xf32>
    %108 = vector.broadcast %32 : vector<1x1x128xf32> to vector<8x1x128xf32>
    %109 = vector.broadcast %86 : vector<8x1x1xf32> to vector<8x1x128xf32>
    %110 = arith.mulf %108, %109 : vector<8x1x128xf32>
    %111 = vector.broadcast %51 : vector<1x1x128xf32> to vector<8x1x128xf32>
    %112 = arith.addf %110, %111 : vector<8x1x128xf32>
    %113 = vector.broadcast %34 : vector<1x1x128xf32> to vector<1x16x128xf32>
    %114 = vector.broadcast %96 : vector<1x16x1xf32> to vector<1x16x128xf32>
    %115 = arith.mulf %113, %114 : vector<1x16x128xf32>
    %116 = vector.broadcast %112 : vector<8x1x128xf32> to vector<8x16x128xf32>
    %117 = vector.broadcast %115 : vector<1x16x128xf32> to vector<8x16x128xf32>
    %118 = arith.subf %116, %117 : vector<8x16x128xf32>
    %119 = vector.broadcast %36 : vector<1x1x128xf32> to vector<8x1x128xf32>
    %120 = vector.broadcast %86 : vector<8x1x1xf32> to vector<8x1x128xf32>
    %121 = arith.mulf %119, %120 : vector<8x1x128xf32>
    %122 = vector.broadcast %53 : vector<1x1x128xf32> to vector<8x1x128xf32>
    %123 = arith.addf %121, %122 : vector<8x1x128xf32>
    %124 = vector.broadcast %38 : vector<1x1x128xf32> to vector<1x16x128xf32>
    %125 = vector.broadcast %96 : vector<1x16x1xf32> to vector<1x16x128xf32>
    %126 = arith.mulf %124, %125 : vector<1x16x128xf32>
    %127 = vector.broadcast %123 : vector<8x1x128xf32> to vector<8x16x128xf32>
    %128 = vector.broadcast %126 : vector<1x16x128xf32> to vector<8x16x128xf32>
    %129 = arith.subf %127, %128 : vector<8x16x128xf32>
    %130 = arith.minimumf %118, %129 : vector<8x16x128xf32>
    %131 = arith.minimumf %107, %130 : vector<8x16x128xf32>
    %132 = vector.broadcast %63 : vector<1x1x128xf32> to vector<8x1x128xf32>
    %133 = vector.broadcast %86 : vector<8x1x1xf32> to vector<8x1x128xf32>
    %134 = arith.mulf %132, %133 : vector<8x1x128xf32>
    %135 = vector.broadcast %73 : vector<1x1x128xf32> to vector<8x1x128xf32>
    %136 = arith.addf %134, %135 : vector<8x1x128xf32>
    %137 = vector.broadcast %68 : vector<1x1x128xf32> to vector<1x16x128xf32>
    %138 = vector.broadcast %96 : vector<1x16x1xf32> to vector<1x16x128xf32>
    %139 = arith.mulf %137, %138 : vector<1x16x128xf32>
    %140 = vector.broadcast %136 : vector<8x1x128xf32> to vector<8x16x128xf32>
    %141 = vector.broadcast %139 : vector<1x16x128xf32> to vector<8x16x128xf32>
    %142 = arith.subf %140, %141 : vector<8x16x128xf32>
    %cst_33 = arith.constant 0.000000e+00 : f32
    %143 = vector.broadcast %cst_33 : f32 to vector<8x16x128xf32>
    %144 = arith.cmpf oge, %142, %143 : vector<8x16x128xf32>
    %cst_34 = arith.constant 1.000000e-10 : f32
    %145 = vector.broadcast %cst_34 : f32 to vector<8x16x128xf32>
    %146 = arith.maximumf %142, %145 : vector<8x16x128xf32>
    %cst_35 = arith.constant -1.000000e-10 : f32
    %147 = vector.broadcast %cst_35 : f32 to vector<8x16x128xf32>
    %148 = arith.minimumf %142, %147 : vector<8x16x128xf32>
    %149 = arith.select %144, %146, %148 : vector<8x16x128xi1>, vector<8x16x128xf32>
    %150 = tpu.reciprocal %149 {approx = true} : vector<8x16x128xf32> -> vector<8x16x128xf32>
    %151 = vector.broadcast %58 : vector<1x1x128xf32> to vector<8x16x128xf32>
    %152 = arith.mulf %151, %150 : vector<8x16x128xf32>
    %153 = arith.minimumf %131, %152 : vector<8x16x128xf32>
    %cst_36 = arith.constant 0.000000e+00 : f32
    %154 = vector.broadcast %cst_36 : f32 to vector<8x16x128xf32>
    %155 = arith.cmpf oge, %153, %154 : vector<8x16x128xf32>
    %cst_37 = arith.constant 1.000000e+30 : f32
    %156 = vector.broadcast %cst_37 : f32 to vector<8x16x128xf32>
    %157 = arith.select %155, %152, %156 : vector<8x16x128xi1>, vector<8x16x128xf32>
    %cst_38 = arith.constant dense<0x7F800000> : vector<8x16xf32>
    %158 = vector.multi_reduction <minimumf>, %157, %cst_38 [2] : vector<8x16x128xf32> to vector<8x16xf32>
    %c0_39 = arith.constant 0 : index
    %c0_40 = arith.constant 0 : index
    %c0_41 = arith.constant 0 : index
    %159 = vector.load %arg4[%c0_39, %c0_40, %c0_41] : memref<1x8x16xf32, #tpu.memory_space<vmem>>, vector<1x8x16xf32>
    %160 = vector.shape_cast %159 : vector<1x8x16xf32> to vector<8x16xf32>
    %161 = arith.minimumf %160, %158 : vector<8x16xf32>
    %c0_42 = arith.constant 0 : index
    %c0_43 = arith.constant 0 : index
    %c0_44 = arith.constant 0 : index
    %162 = vector.load %arg4[%c0_42, %c0_43, %c0_44] : memref<1x8x16xf32, #tpu.memory_space<vmem>>, vector<1x8x16xf32>
    %163 = vector.shape_cast %162 : vector<1x8x16xf32> to vector<8x16xf32>
    %164 = vector.shape_cast %161 : vector<8x16xf32> to vector<1x8x16xf32>
    tpu.vector_store %arg4[%c0_42, %c0_43, %c0_44], %164 {strides = array<i32>} : memref<1x8x16xf32, #tpu.memory_space<vmem>>, vector<1x8x16xf32>,
    %c0_i32_45 = arith.constant 0 : i32
    %165 = arith.cmpi eq, %arg2, %c0_i32_45 : i32
    %166 = arith.extui %165 : i1 to i32
    %c0_i32_46 = arith.constant 0 : i32
    %167 = arith.cmpi ne, %166, %c0_i32_46 : i32
    scf.if %167 {
      %c0_47 = arith.constant 0 : index
      %c0_48 = arith.constant 0 : index
      %c0_49 = arith.constant 0 : index
      %168 = vector.load %arg4[%c0_47, %c0_48, %c0_49] : memref<1x8x16xf32, #tpu.memory_space<vmem>>, vector<1x8x16xf32>
      %169 = vector.shape_cast %168 : vector<1x8x16xf32> to vector<8x16xf32>
      %cst_50 = arith.constant 1.000000e+29 : f32
      %170 = vector.broadcast %cst_50 : f32 to vector<8x16xf32>
      %171 = arith.cmpf oge, %169, %170 : vector<8x16xf32>
      %cst_51 = arith.constant -1.000000e+00 : f32
      %172 = vector.broadcast %cst_51 : f32 to vector<8x16xf32>
      %173 = arith.select %171, %172, %169 : vector<8x16xi1>, vector<8x16xf32>
      %c0_52 = arith.constant 0 : index
      %c0_53 = arith.constant 0 : index
      %c0_54 = arith.constant 0 : index
      %174 = vector.load %arg4[%c0_52, %c0_53, %c0_54] : memref<1x8x16xf32, #tpu.memory_space<vmem>>, vector<1x8x16xf32>
      %175 = vector.shape_cast %174 : vector<1x8x16xf32> to vector<8x16xf32>
      %176 = vector.shape_cast %173 : vector<8x16xf32> to vector<1x8x16xf32>
      tpu.vector_store %arg4[%c0_52, %c0_53, %c0_54], %176 {strides = array<i32>} : memref<1x8x16xf32, #tpu.memory_space<vmem>>, vector<1x8x16xf32>,
    } else {
    }
    return
  }
  func.func @transform_0(%arg0: i32, %arg1: i32, %arg2: i32) -> (i32, i32, i32) {
    %c0_i32 = arith.constant 0 : i32
    %c0_i32_0 = arith.constant 0 : i32
    return %arg0, %c0_i32, %arg2 : i32, i32, i32
  }
  func.func @transform_1(%arg0: i32, %arg1: i32, %arg2: i32) -> (i32, i32, i32) {
    %c0_i32 = arith.constant 0 : i32
    %c0_i32_0 = arith.constant 0 : i32
    return %arg0, %arg1, %c0_i32 : i32, i32, i32
  }
}

</mosaic_0001>

<llo_original>
// kernel: depth_renderer_forward.2
$region0: #{depth_renderer_forward.2}
  #allocation0 [shape = 'u32[]', space=smem, size = 0x4, offset = 0x4, fixed_abs, tag = 'smem constant byte address 0x4 - core index']
  #allocation1 [shape = 'u32[144,128]{1,0:T(1,128)}', space=vmem, size = 0x12000, scoped, tag = 'internal scratch']
  %s0 = inlined_call_operand.vmem [shape: f32[2,16], index: 0, kind: input, shape index: {}]
  %s1 = inlined_call_operand.vmem [shape: f32[2,3,128], index: 1, kind: input, shape index: {}]
  %s2 = inlined_call_operand.vmem [shape: f32[2,4,128], index: 2, kind: output, shape index: {}]
  %s3 = sld [smem:[#allocation0]]
  $region45: #{depth_renderer_forward.2} parent=0
    _
  %s5 = ssub.s32 1, %s3
  %s6 = scalar_select 0, %s5, %s3
  $region1: #{depth_renderer_forward.2} parent=0
    #allocation2 [shape = 'u8[1024]{0}', space=smem, size = 0x400, scoped, tag = 'input window, operand 0, single buffered']
    #allocation3 [shape = 's32[2]{0}', space=sflag, size = 0x8, scoped, tag = 'scoped memory for depth_renderer_forward.2']
    %7 = vsyncpa [#allocation3], 0
    loop: start=0, step=1, limit=4
    $region2: #{depth_renderer_forward.2} parent=1 // loop_pre_header
      _
    $region3: #{depth_renderer_forward.2} parent=1 // loop_header
      %s9 = sphi 0, %s13
      %p10 = scmp.ge.s32.totalorder %s9, 4
      %s17 = sphi 0, %s17
      %s19 = sphi 0, %s17
      %s20 = sphi 0, %s19
      %s34 = sphi 0, %s20
      %s40 = sphi 0, %s42
      %s43 = sphi 0, %s40
      %s44 = sphi 0, %s43
      %s60 = sphi 0, %s44
      %s66 = sphi 0, %s68
      %s69 = sphi 0, %s66
      %s70 = sphi 0, %s69
      %s86 = sphi 0, %s70
    $region4: #{depth_renderer_forward.2} parent=1 // loop_header_branch
      %12 = sbr.rel (%p10) target = $region8
    $region5: #{depth_renderer_forward.2} parent=1 // loop_body
      %s14 = ssub.s32 %s9, 1
      %s15 = ssub.s32 %s9, 2
      %s16 = sadd.s32 %s9, 1
      %s18 = sadd.s32 %s17, 1
      %p21 = scmp.eq.s32.totalorder %s9, 1
      %p22 = scmp.ne.s32.totalorder %s17, %s19
      %p23 = scmp.eq.s32.totalorder %s9, 0
      %p24 = por %p22, %p23
      %p25 = scmp.ne.s32.totalorder %s17, %s19
      %p26 = scmp.eq.s32.totalorder %s14, 1
      %p27 = por %p25, %p26
      %p28 = scmp.ne.s32.totalorder %s19, %s20
      %p29 = scmp.eq.s32.totalorder %s14, 0
      %p30 = por %p28, %p29
      %p31 = scmp.ne.s32.totalorder %s19, %s20
      %p32 = scmp.eq.s32.totalorder %s15, 1
      %p33 = por %p31, %p32
      %p35 = scmp.ne.s32.totalorder %s20, %s34
      %p36 = scmp.eq.s32.totalorder %s15, 0
      %p37 = por %p35, %p36
      %s38 = ssub.s32 %s9, %s16
      %p39 = scmp.eq.s32.totalorder %s38, 0
      %s41 = sadd.s32 %s40, 1
      %s42 = scalar_select %p39, %s40, %s41
      %p45 = pneg %p39
      %p46 = scmp.eq.s32.totalorder %s9, 1
      %p47 = por %p45, %p46
      %p48 = scmp.ne.s32.totalorder %s40, %s43
      %p49 = scmp.eq.s32.totalorder %s9, 0
      %p50 = por %p48, %p49
      %p51 = scmp.ne.s32.totalorder %s40, %s43
      %p52 = scmp.eq.s32.totalorder %s14, 1
      %p53 = por %p51, %p52
      %p54 = scmp.ne.s32.totalorder %s43, %s44
      %p55 = scmp.eq.s32.totalorder %s14, 0
      %p56 = por %p54, %p55
      %p57 = scmp.ne.s32.totalorder %s43, %s44
      %p58 = scmp.eq.s32.totalorder %s15, 1
      %p59 = por %p57, %p58
      %p61 = scmp.ne.s32.totalorder %s44, %s60
      %p62 = scmp.eq.s32.totalorder %s15, 0
      %p63 = por %p61, %p62
      %s64 = ssub.s32 %s9, %s16
      %p65 = scmp.eq.s32.totalorder %s64, 0
      %s67 = sadd.s32 %s66, 1
      %s68 = scalar_select %p65, %s66, %s67
      %p71 = pneg %p65
      %p72 = scmp.eq.s32.totalorder %s9, 1
      %p73 = por %p71, %p72
      %p74 = scmp.ne.s32.totalorder %s66, %s69
      %p75 = scmp.eq.s32.totalorder %s9, 0
      %p76 = por %p74, %p75
      %p77 = scmp.ne.s32.totalorder %s66, %s69
      %p78 = scmp.eq.s32.totalorder %s14, 1
      %p79 = por %p77, %p78
      %p80 = scmp.ne.s32.totalorder %s69, %s70
      %p81 = scmp.eq.s32.totalorder %s14, 0
      %p82 = por %p80, %p81
      %p83 = scmp.ne.s32.totalorder %s69, %s70
      %p84 = scmp.eq.s32.totalorder %s15, 1
      %p85 = por %p83, %p84
      %p87 = scmp.ne.s32.totalorder %s70, %s86
      %p88 = scmp.eq.s32.totalorder %s15, 0
      %p89 = por %p87, %p88
      %p90 = scmp.le.s32.totalorder 1, %s9
      %p91 = scmp.lt.s32.totalorder %s9, 3
      %p92 = pnand %p90, %p91
      %p93 = pneg %p92
      // Predicated region
      $region9: #{depth_renderer_forward.2} parent=5 // pred_check
        _
      $region10: #{depth_renderer_forward.2} parent=5 // pred_check_branch
        %95 = sbr.rel (%p92) target = $region12
      $region11: #{depth_renderer_forward.2} parent=5 // pred_region
        %s96 = ssub.s32 %s9, 1
        // Predicated region
        $region13: #{depth_renderer_forward.2} parent=11 // pred_check
          %p97 = pneg %p30
        $region14: #{depth_renderer_forward.2} parent=11 // pred_check_branch
          %99 = sbr.rel (%p97) target = $region16
        $region15: #{depth_renderer_forward.2} parent=11 // pred_region
          %s101 = ssub.s32 32, 32
          %102 = vsyncadd [#allocation3], %s101
          %s104 = sshll.u32 %s0, 4
          %s105 = int_to_ptr.vmem [resolvable:$true] %s104
          %107 = dma.vmem_to_smem %s105, 32, [#allocation2], [#allocation3]
        $region16: #{depth_renderer_forward.2} parent=11 // pred_fallthru
          _
      $region12: #{depth_renderer_forward.2} parent=5 // pred_fallthru
        _
      %p108 = scmp.lt.s32.totalorder %s9, 2
      // Predicated region
      $region17: #{depth_renderer_forward.2} parent=5 // pred_check
        %p109 = pneg %p108
      $region18: #{depth_renderer_forward.2} parent=5 // pred_check_branch
        %111 = sbr.rel (%p109) target = $region20
      $region19: #{depth_renderer_forward.2} parent=5 // pred_region
        // Predicated region
        $region21: #{depth_renderer_forward.2} parent=19 // pred_check
          %p112 = pneg %p50
        $region22: #{depth_renderer_forward.2} parent=19 // pred_check_branch
          %114 = sbr.rel (%p112) target = $region24
        $region23: #{depth_renderer_forward.2} parent=19 // pred_region
          %p115 = scmp.lt.s32.totalorder %s9, 1
          %s116 = scalar_select %p115, %s9, 1
          %s117 = smul.addr %s116, 4
          %s118 = scalar_lea.vmem %s1, %s117
        $region24: #{depth_renderer_forward.2} parent=19 // pred_fallthru
          _
      $region20: #{depth_renderer_forward.2} parent=5 // pred_fallthru
        _
      %p119 = scmp.le.s32.totalorder 1, %s9
      %p120 = scmp.lt.s32.totalorder %s9, 3
      %p121 = pnand %p119, %p120
      %p122 = pneg %p121
      // Predicated region
      $region25: #{depth_renderer_forward.2} parent=5 // pred_check
        _
      $region26: #{depth_renderer_forward.2} parent=5 // pred_check_branch
        %124 = sbr.rel (%p121) target = $region28
      $region27: #{depth_renderer_forward.2} parent=5 // pred_region
        %s125 = ssub.s32 %s9, 1
        // Predicated region
        $region29: #{depth_renderer_forward.2} parent=27 // pred_check
          %p126 = pneg %p30
        $region30: #{depth_renderer_forward.2} parent=27 // pred_check_branch
          %128 = sbr.rel (%p126) target = $region32
        $region31: #{depth_renderer_forward.2} parent=27 // pred_region
          %129 = dma.done [#allocation3], 32
        $region32: #{depth_renderer_forward.2} parent=27 // pred_fallthru
          _
        %130 = sfence
        %p131 = pneg %p30
        %p132 = pneg %p27
        %p133 = scmp.lt.s32.totalorder %s14, 1
        %s134 = scalar_select %p133, %s14, 1
        %s135 = smul.addr %s134, 4
        %s136 = scalar_lea.vmem %s1, %s135
        %p137 = pneg %p56
        %p138 = pneg %p53
        %p139 = pneg %p82
        %p140 = pneg %p79
        %p141 = scmp.lt.s32.totalorder %s14, 1
        %s142 = scalar_select %p141, %s14, 1
        %s143 = smul.addr %s142, 4
        %s144 = scalar_lea.vmem %s2, %s143
        %p145 = scmp.lt.s32.totalorder %s14, 1
        %s146 = scalar_select %p145, %s14, 1
        %s147 = smul.addr %s146, 4
        %s148 = scalar_lea.vmem %s1, %s147
        %p149 = scmp.lt.s32.totalorder %s14, 1
        %s150 = scalar_select %p149, %s14, 1
        %s151 = smul.addr %s150, 4
        %s152 = scalar_lea.vmem %s2, %s151
        %v153 = vld [vmem:[%s148] sm:$0x7]
        %s154 = smul.u32 %s14, 128
        %s155 = sld [smem:[#allocation2 + %s154]]
        %v156 = vstv %s155
        %v157 = vmul.f32 %v153, %v156
        %s158 = sadd.s32 %s154, 4
        %s159 = sld [smem:[#allocation2 + %s158]]
        %v160 = vstv %s159
        %v161 = vmul.f32 %v153, %v160
        %v163 = vrot.slane %v161, 1
        %v165 = vadd.f32 %v157, %v163
        %s166 = sadd.s32 %s154, 8
        %s167 = sld [smem:[#allocation2 + %s166]]
        %v168 = vstv %s167
        %v169 = vmul.f32 %v153, %v168
        %v171 = vrot.slane %v169, 2
        %v173 = vadd.f32 %v165, %v171
        %s174 = sadd.s32 %s154, 12
        %s175 = sld [smem:[#allocation2 + %s174]]
        %v176 = vstv %s175
        %v177 = vadd.f32 %v173, %v176
        %s178 = sadd.s32 %s154, 1
        %s179 = sld [smem:[#allocation2 + %s178]]
        %v180 = vstv %s179
        %v181 = vmul.f32 %v153, %v180
        %s182 = sadd.s32 %s154, 5
        %s183 = sld [smem:[#allocation2 + %s182]]
        %v184 = vstv %s183
        %v185 = vmul.f32 %v153, %v184
        %v187 = vrot.slane %v185, 1
        %v189 = vadd.f32 %v181, %v187
        %s190 = sadd.s32 %s154, 9
        %s191 = sld [smem:[#allocation2 + %s190]]
        %v192 = vstv %s191
        %v193 = vmul.f32 %v153, %v192
        %v195 = vrot.slane %v193, 2
        %v197 = vadd.f32 %v189, %v195
        %s198 = sadd.s32 %s154, 13
        %s199 = sld [smem:[#allocation2 + %s198]]
        %v200 = vstv %s199
        %v201 = vadd.f32 %v197, %v200
        %s202 = sadd.s32 %s154, 2
        %s203 = sld [smem:[#allocation2 + %s202]]
        %v204 = vstv %s203
        %v205 = vmul.f32 %v153, %v204
        %s206 = sadd.s32 %s154, 6
        %s207 = sld [smem:[#allocation2 + %s206]]
        %v208 = vstv %s207
        %v209 = vmul.f32 %v153, %v208
        %v211 = vrot.slane %v209, 1
        %v213 = vadd.f32 %v205, %v211
        %s214 = sadd.s32 %s154, 10
        %s215 = sld [smem:[#allocation2 + %s214]]
        %v216 = vstv %s215
        %v217 = vmul.f32 %v153, %v216
        %v219 = vrot.slane %v217, 2
        %v221 = vadd.f32 %v213, %v219
        %s222 = sadd.s32 %s154, 14
        %s223 = sld [smem:[#allocation2 + %s222]]
        %v224 = vstv %s223
        %v225 = vadd.f32 %v221, %v224
        %s226 = sadd.s32 %s154, 3
        %s227 = sld [smem:[#allocation2 + %s226]]
        %v228 = vstv %s227
        %v229 = vmul.f32 %v153, %v228
        %s230 = sadd.s32 %s154, 7
        %s231 = sld [smem:[#allocation2 + %s230]]
        %v232 = vstv %s231
        %v233 = vmul.f32 %v153, %v232
        %v235 = vrot.slane %v233, 1
        %v237 = vadd.f32 %v229, %v235
        %s238 = sadd.s32 %s154, 11
        %s239 = sld [smem:[#allocation2 + %s238]]
        %v240 = vstv %s239
        %v241 = vmul.f32 %v153, %v240
        %v243 = vrot.slane %v241, 2
        %v245 = vadd.f32 %v237, %v243
        %s246 = sadd.s32 %s154, 15
        %s247 = sld [smem:[#allocation2 + %s246]]
        %v248 = vstv %s247
        %v249 = vadd.f32 %v245, %v248
        %v250 = vand.u32 2147483647, %v249
        %vm251 = vcmp.lt.f32.partialorder %v250, 1e-08
        %v252 = vsel %vm251, 1e-08, %v249
        %v253 = vrcp.pop %v252
        %v254 = vmul.f32 1.0, %v253
        %v255 = vmul.f32 %v177, %v254
        %v256 = vmul.f32 %v201, %v254
        %v257 = vmul.f32 %v225, %v254
        %v259 = vrot.slane %v256, 7
        %v262 = vrot.slane %v249, 6
        %v265 = vrot.slane %v257, 5
        %vm267 = vcmask 1040384
        %v268 = vsel %vm267, %v255, %v259
        %vm269 = vcmask 1041408
        %v270 = vsel %vm269, %v268, %v262
        %vm271 = vcmask 1042432
        %v272 = vsel %vm271, %v270, %v265
        %273 = vst [vmem:[%s152] sm:$0xf] %v272
        %p274 = scmp.lt.s32.totalorder %s14, 1
        %s275 = scalar_select %p274, %s14, 1
        %s276 = smul.addr %s275, 4
        %s277 = scalar_lea.vmem %s2, %s276
        // Predicated region
        $region33: #{depth_renderer_forward.2} parent=27 // pred_check
          %p278 = pneg %p79
        $region34: #{depth_renderer_forward.2} parent=27 // pred_check_branch
          %280 = sbr.rel (%p278) target = $region36
        $region35: #{depth_renderer_forward.2} parent=27 // pred_region
          _
        $region36: #{depth_renderer_forward.2} parent=27 // pred_fallthru
          _
      $region28: #{depth_renderer_forward.2} parent=5 // pred_fallthru
        _
      %p281 = scmp.le.s32.totalorder 2, %s9
      // Predicated region
      $region37: #{depth_renderer_forward.2} parent=5 // pred_check
        %p282 = pneg %p281
      $region38: #{depth_renderer_forward.2} parent=5 // pred_check_branch
        %284 = sbr.rel (%p282) target = $region40
      $region39: #{depth_renderer_forward.2} parent=5 // pred_region
        %s285 = ssub.s32 %s9, 2
        // Predicated region
        $region41: #{depth_renderer_forward.2} parent=39 // pred_check
          %p286 = pneg %p85
        $region42: #{depth_renderer_forward.2} parent=39 // pred_check_branch
          %288 = sbr.rel (%p286) target = $region44
        $region43: #{depth_renderer_forward.2} parent=39 // pred_region
          %p289 = scmp.lt.s32.totalorder %s15, 1
          %s290 = scalar_select %p289, %s15, 1
          %s291 = smul.addr %s290, 4
          %s292 = scalar_lea.vmem %s2, %s291
        $region44: #{depth_renderer_forward.2} parent=39 // pred_fallthru
          _
      $region40: #{depth_renderer_forward.2} parent=5 // pred_fallthru
        _
    $region6: #{depth_renderer_forward.2} parent=1 // loop_footer
      %s13 = sadd.s32 1, %s9
    $region7: #{depth_renderer_forward.2} parent=1 // loop_footer_branch
      %8 = sbr.rel target = $region3
    $region8: #{depth_renderer_forward.2} parent=1 // loop_exit
      _
    %293 = vsyncpa [#allocation3], 1
    %s294 = scalar_lea.sflag [#allocation3], 1
    %295 = vsyncpa %s294, 1

// kernel: depth_renderer_forward.3
$region0: #{depth_renderer_forward.3}
  #allocation0 [shape = 'u32[]', space=smem, size = 0x4, offset = 0x4, fixed_abs, tag = 'smem constant byte address 0x4 - core index']
  #allocation1 [shape = 'u32[144,128]{1,0:T(1,128)}', space=vmem, size = 0x12000, scoped, tag = 'internal scratch']
  %s0 = inlined_call_operand.vmem [shape: f32[2,9,128], index: 0, kind: input, shape index: {}]
  %s1 = inlined_call_operand.vmem [shape: f32[2,16,16], index: 1, kind: output, shape index: {}]
  %s2 = sld [smem:[#allocation0]]
  $region45: #{depth_renderer_forward.3} parent=0
    _
  %s4 = ssub.s32 1, %s2
  %s5 = scalar_select 0, %s4, %s2
  loop: start=0, step=1, limit=6
  $region2: #{depth_renderer_forward.3} parent=0 // loop_pre_header
    _
  $region3: #{depth_renderer_forward.3} parent=0 // loop_header
    %s7 = sphi 0, %s11
    %p8 = scmp.ge.s32.totalorder %s7, 6
    %s14 = sphi 0, %s33
    %s15 = sphi 0, %s29
    %s16 = sphi 0, %s25
    %s17 = sphi 0, %s14
    %s18 = sphi 0, %s15
    %s19 = sphi 0, %s16
    %s20 = sphi 0, %s17
    %s21 = sphi 0, %s18
    %s22 = sphi 0, %s19
    %s38 = sphi 0, %s40
    %s41 = sphi 0, %s38
    %s42 = sphi 0, %s41
    %s58 = sphi 0, %s42
    %s66 = sphi 0, %s68
    %s69 = sphi 0, %s66
    %s70 = sphi 0, %s69
    %s86 = sphi 0, %s70
  $region4: #{depth_renderer_forward.3} parent=0 // loop_header_branch
    %10 = sbr.rel (%p8) target = $region8
  $region5: #{depth_renderer_forward.3} parent=0 // loop_body
    %s12 = ssub.s32 %s7, 1
    %s13 = ssub.s32 %s7, 2
    %s23 = sadd.s32 1, %s16
    %p24 = scmp.ge.s32.totalorder %s23, 1
    %s25 = scalar_select %p24, 0, %s23
    %s26 = sadd.s32 1, %s15
    %s27 = scalar_select %p24, %s26, %s15
    %p28 = scmp.ge.s32.totalorder %s27, 2
    %s29 = scalar_select %p28, 0, %s27
    %s30 = sadd.s32 1, %s14
    %s31 = scalar_select %p28, %s30, %s14
    %p32 = scmp.ge.s32.totalorder %s31, 2
    %s33 = scalar_select %p32, 0, %s31
    %s34 = ssub.s32 %s14, %s33
    %s35 = ssub.s32 %s16, %s25
    %s36 = sor.u32 %s34, %s35
    %p37 = scmp.eq.s32.totalorder %s36, 0
    %s39 = sadd.s32 %s38, 1
    %s40 = scalar_select %p37, %s38, %s39
    %p43 = pneg %p37
    %p44 = scmp.eq.s32.totalorder %s7, 3
    %p45 = por %p43, %p44
    %p46 = scmp.ne.s32.totalorder %s38, %s41
    %p47 = scmp.eq.s32.totalorder %s7, 0
    %p48 = por %p46, %p47
    %p49 = scmp.ne.s32.totalorder %s38, %s41
    %p50 = scmp.eq.s32.totalorder %s12, 3
    %p51 = por %p49, %p50
    %p52 = scmp.ne.s32.totalorder %s41, %s42
    %p53 = scmp.eq.s32.totalorder %s12, 0
    %p54 = por %p52, %p53
    %p55 = scmp.ne.s32.totalorder %s41, %s42
    %p56 = scmp.eq.s32.totalorder %s13, 3
    %p57 = por %p55, %p56
    %p59 = scmp.ne.s32.totalorder %s42, %s58
    %p60 = scmp.eq.s32.totalorder %s13, 0
    %p61 = por %p59, %p60
    %s62 = ssub.s32 %s14, %s33
    %s63 = ssub.s32 %s15, %s29
    %s64 = sor.u32 %s62, %s63
    %p65 = scmp.eq.s32.totalorder %s64, 0
    %s67 = sadd.s32 %s66, 1
    %s68 = scalar_select %p65, %s66, %s67
    %p71 = pneg %p65
    %p72 = scmp.eq.s32.totalorder %s7, 3
    %p73 = por %p71, %p72
    %p74 = scmp.ne.s32.totalorder %s66, %s69
    %p75 = scmp.eq.s32.totalorder %s7, 0
    %p76 = por %p74, %p75
    %p77 = scmp.ne.s32.totalorder %s66, %s69
    %p78 = scmp.eq.s32.totalorder %s12, 3
    %p79 = por %p77, %p78
    %p80 = scmp.ne.s32.totalorder %s69, %s70
    %p81 = scmp.eq.s32.totalorder %s12, 0
    %p82 = por %p80, %p81
    %p83 = scmp.ne.s32.totalorder %s69, %s70
    %p84 = scmp.eq.s32.totalorder %s13, 3
    %p85 = por %p83, %p84
    %p87 = scmp.ne.s32.totalorder %s70, %s86
    %p88 = scmp.eq.s32.totalorder %s13, 0
    %p89 = por %p87, %p88
    %p90 = scmp.le.s32.totalorder 1, %s7
    %p91 = scmp.lt.s32.totalorder %s7, 5
    %p92 = pnand %p90, %p91
    %p93 = pneg %p92
    // Predicated region
    $region9: #{depth_renderer_forward.3} parent=5 // pred_check
      _
    $region10: #{depth_renderer_forward.3} parent=5 // pred_check_branch
      %95 = sbr.rel (%p92) target = $region12
    $region11: #{depth_renderer_forward.3} parent=5 // pred_region
      %s96 = ssub.s32 %s7, 1
    $region12: #{depth_renderer_forward.3} parent=5 // pred_fallthru
      _
    %p97 = scmp.lt.s32.totalorder %s7, 4
    // Predicated region
    $region13: #{depth_renderer_forward.3} parent=5 // pred_check
      %p98 = pneg %p97
    $region14: #{depth_renderer_forward.3} parent=5 // pred_check_branch
      %100 = sbr.rel (%p98) target = $region16
    $region15: #{depth_renderer_forward.3} parent=5 // pred_region
      // Predicated region
      $region17: #{depth_renderer_forward.3} parent=15 // pred_check
        %p101 = pneg %p48
      $region18: #{depth_renderer_forward.3} parent=15 // pred_check_branch
        %103 = sbr.rel (%p101) target = $region20
      $region19: #{depth_renderer_forward.3} parent=15 // pred_region
        %p104 = scmp.lt.s32.totalorder %s14, 1
        %s105 = scalar_select %p104, %s14, 1
        %p106 = scmp.lt.s32.totalorder %s16, 0
        %s107 = scalar_select %p106, %s16, 0
        %s108 = smul.addr %s105, 2
        %s109 = sadd.s32 %s107, %s108
        %s110 = smul.addr %s109, 8
        %s111 = scalar_lea.vmem %s0, %s110
      $region20: #{depth_renderer_forward.3} parent=15 // pred_fallthru
        _
    $region16: #{depth_renderer_forward.3} parent=5 // pred_fallthru
      _
    %p112 = scmp.le.s32.totalorder 1, %s7
    %p113 = scmp.lt.s32.totalorder %s7, 5
    %p114 = pnand %p112, %p113
    %p115 = pneg %p114
    // Predicated region
    $region21: #{depth_renderer_forward.3} parent=5 // pred_check
      _
    $region22: #{depth_renderer_forward.3} parent=5 // pred_check_branch
      %117 = sbr.rel (%p114) target = $region24
    $region23: #{depth_renderer_forward.3} parent=5 // pred_region
      %s118 = ssub.s32 %s7, 1
      %p119 = scmp.lt.s32.totalorder %s17, 1
      %s120 = scalar_select %p119, %s17, 1
      %p121 = scmp.lt.s32.totalorder %s19, 0
      %s122 = scalar_select %p121, %s19, 0
      %s123 = smul.addr %s120, 2
      %s124 = sadd.s32 %s122, %s123
      %s125 = smul.addr %s124, 8
      %s126 = scalar_lea.vmem %s0, %s125
      %p127 = pneg %p54
      %p128 = pneg %p51
      %p129 = pneg %p82
      %p130 = pneg %p79
      %p131 = scmp.lt.s32.totalorder %s17, 1
      %s132 = scalar_select %p131, %s17, 1
      %p133 = scmp.lt.s32.totalorder %s18, 1
      %s134 = scalar_select %p133, %s18, 1
      %s135 = smul.addr %s132, 2
      %s136 = sadd.s32 %s134, %s135
      %s137 = smul.addr %s136, 8
      %s138 = scalar_lea.vmem %s1, %s137
      %p139 = scmp.lt.s32.totalorder %s17, 1
      %s140 = scalar_select %p139, %s17, 1
      %p141 = scmp.lt.s32.totalorder %s19, 0
      %s142 = scalar_select %p141, %s19, 0
      %s143 = smul.addr %s140, 2
      %s144 = sadd.s32 %s142, %s143
      %s145 = smul.addr %s144, 8
      %s146 = scalar_lea.vmem %s0, %s145
      %p147 = scmp.lt.s32.totalorder %s17, 1
      %s148 = scalar_select %p147, %s17, 1
      %p149 = scmp.lt.s32.totalorder %s18, 1
      %s150 = scalar_select %p149, %s18, 1
      %s151 = smul.addr %s148, 2
      %s152 = sadd.s32 %s150, %s151
      %s153 = smul.addr %s152, 8
      %s154 = scalar_lea.vmem %s1, %s153
      %p155 = scmp.eq.s32.totalorder %s19, 0
      // Predicated region
      $region25: #{depth_renderer_forward.3} parent=23 // pred_check
        %p156 = pneg %p155
      $region26: #{depth_renderer_forward.3} parent=23 // pred_check_branch
        %158 = sbr.rel (%p156) target = $region28
      $region27: #{depth_renderer_forward.3} parent=23 // pred_region
        %vm159 = vcmask 130048
        %160 = vst.msk [vmem:[%s154] sm:$0xff] %vm159, 1e+30
      $region28: #{depth_renderer_forward.3} parent=23 // pred_fallthru
        _
      %v161 = vld [vmem:[%s146] sm:$0x1]
      %v162 = vld [vmem:[%s146 + $0x1] sm:$0x1]
      %v163 = vld [vmem:[%s146 + $0x2] sm:$0x1]
      %v164 = vld [vmem:[%s146 + $0x3] sm:$0x1]
      %v165 = vld [vmem:[%s146 + $0x4] sm:$0x1]
      %v166 = vld [vmem:[%s146 + $0x5] sm:$0x1]
      %v167 = vld [vmem:[%s146 + $0x6] sm:$0x1]
      %v168 = vld [vmem:[%s146 + $0x7] sm:$0x1]
      %v169 = vld [vmem:[%s146 + $0x8] sm:$0x1]
      %v170 = vsub.f32 %v164, %v161
      %v171 = vsub.f32 %v168, %v162
      %v172 = vmul.f32 %v170, %v171
      %v173 = vsub.f32 %v167, %v161
      %v174 = vsub.f32 %v165, %v162
      %v175 = vmul.f32 %v173, %v174
      %v176 = vsub.f32 %v172, %v175
      %v177 = vand.u32 2147483647, %v176
      %vm178 = vcmp.gt.f32.partialorder %v177, 1e-09
      %vm179 = vcmp.ge.f32.partialorder %v176, 0.0
      %v180 = vsel %vm179, 1.0, -1.0
      %v181 = vsub.f32 %v167, %v164
      %v182 = vmul.f32 %v181, %v180
      %v183 = vsub.f32 %v168, %v165
      %v184 = vmul.f32 %v183, %v180
      %v185 = vsub.f32 %v161, %v167
      %v186 = vmul.f32 %v185, %v180
      %v187 = vsub.f32 %v162, %v168
      %v188 = vmul.f32 %v187, %v180
      %v189 = vmul.f32 %v170, %v180
      %v190 = vmul.f32 %v174, %v180
      %v191 = vmul.f32 %v184, %v164
      %v192 = vmul.f32 %v182, %v165
      %v193 = vsub.f32 %v191, %v192
      %v194 = vmul.f32 %v188, %v167
      %v195 = vmul.f32 %v186, %v168
      %v196 = vsub.f32 %v194, %v195
      %v197 = vmul.f32 %v190, %v161
      %v198 = vmul.f32 %v189, %v162
      %v199 = vsub.f32 %v197, %v198
      %v200 = vsel %vm178, %v193, -1e+30
      %v201 = vsel %vm178, %v196, -1e+30
      %v202 = vsel %vm178, %v199, -1e+30
      %v203 = vmul.f32 %v166, %v169
      %v204 = vmul.f32 %v163, %v169
      %v205 = vmul.f32 %v163, %v166
      %v206 = vmul.f32 %v163, %v203
      %v207 = vmul.f32 %v206, %v177
      %v208 = vmul.f32 %v182, %v203
      %v209 = vmul.f32 %v186, %v204
      %v210 = vadd.f32 %v208, %v209
      %v211 = vmul.f32 %v189, %v205
      %v212 = vadd.f32 %v210, %v211
      %v213 = vmul.f32 %v184, %v203
      %v214 = vmul.f32 %v188, %v204
      %v215 = vadd.f32 %v213, %v214
      %v216 = vmul.f32 %v190, %v205
      %v217 = vadd.f32 %v215, %v216
      %v218 = vmul.f32 %v193, %v203
      %v219 = vmul.f32 %v196, %v204
      %v220 = vadd.f32 %v218, %v219
      %v221 = vmul.f32 %v199, %v205
      %v222 = vadd.f32 %v220, %v221
      %s223 = smul.u32 %s18, 8
      %v224 = vstv %s223
      %v225 = vadd.s32 %v224, 1
      %v226 = vadd.s32 %v224, 2
      %v227 = vadd.s32 %v224, 3
      %v228 = vadd.s32 %v224, 4
      %v229 = vadd.s32 %v224, 5
      %v230 = vadd.s32 %v224, 6
      %v231 = vadd.s32 %v224, 7
      %v232 = vcvt.s32.f32 %v224
      %v233 = vcvt.s32.f32 %v225
      %v234 = vcvt.s32.f32 %v226
      %v235 = vcvt.s32.f32 %v227
      %v236 = vcvt.s32.f32 %v228
      %v237 = vcvt.s32.f32 %v229
      %v238 = vcvt.s32.f32 %v230
      %v239 = vcvt.s32.f32 %v231
      %v240 = vmul.f32 %v232, 2.0
      %v241 = vmul.f32 %v233, 2.0
      %v242 = vmul.f32 %v234, 2.0
      %v243 = vmul.f32 %v235, 2.0
      %v244 = vmul.f32 %v236, 2.0
      %v245 = vmul.f32 %v237, 2.0
      %v246 = vmul.f32 %v238, 2.0
      %v247 = vmul.f32 %v239, 2.0
      %v248 = vadd.f32 %v240, 1.0
      %v249 = vadd.f32 %v241, 1.0
      %v250 = vadd.f32 %v242, 1.0
      %v251 = vadd.f32 %v243, 1.0
      %v252 = vadd.f32 %v244, 1.0
      %v253 = vadd.f32 %v245, 1.0
      %v254 = vadd.f32 %v246, 1.0
      %v255 = vadd.f32 %v247, 1.0
      %v256 = vrcp.pop 16.0
      %v257 = vmul.f32 %v248, %v256
      %v258 = vmul.f32 %v249, %v256
      %v259 = vmul.f32 %v250, %v256
      %v260 = vmul.f32 %v251, %v256
      %v261 = vmul.f32 %v252, %v256
      %v262 = vmul.f32 %v253, %v256
      %v263 = vmul.f32 %v254, %v256
      %v264 = vmul.f32 %v255, %v256
      %v265 = vsub.f32 1.0, %v257
      %v266 = vsub.f32 1.0, %v258
      %v267 = vsub.f32 1.0, %v259
      %v268 = vsub.f32 1.0, %v260
      %v269 = vsub.f32 1.0, %v261
      %v270 = vsub.f32 1.0, %v262
      %v271 = vsub.f32 1.0, %v263
      %v272 = vsub.f32 1.0, %v264
      %v273 = vlaneseq
      %v274 = vshrl.u32 %v273, 7
      %v275 = vadd.s32 %v274, 8
      %v276 = vcvt.s32.f32 %v274
      %v277 = vcvt.s32.f32 %v275
      %v278 = vmul.f32 %v276, 2.0
      %v279 = vmul.f32 %v277, 2.0
      %v280 = vadd.f32 %v278, 1.0
      %v281 = vadd.f32 %v279, 1.0
      %v282 = vmul.f32 %v280, %v256
      %v283 = vmul.f32 %v281, %v256
      %v284 = vsub.f32 1.0, %v282
      %v285 = vsub.f32 1.0, %v283
      %v286 = vmul.f32 %v182, %v265
      %v287 = vmul.f32 %v182, %v266
      %v288 = vmul.f32 %v182, %v267
      %v289 = vmul.f32 %v182, %v268
      %v290 = vmul.f32 %v182, %v269
      %v291 = vmul.f32 %v182, %v270
      %v292 = vmul.f32 %v182, %v271
      %v293 = vmul.f32 %v182, %v272
      %v294 = vadd.f32 %v286, %v200
      %v295 = vadd.f32 %v287, %v200
      %v296 = vadd.f32 %v288, %v200
      %v297 = vadd.f32 %v289, %v200
      %v298 = vadd.f32 %v290, %v200
      %v299 = vadd.f32 %v291, %v200
      %v300 = vadd.f32 %v292, %v200
      %v301 = vadd.f32 %v293, %v200
      %v302 = vlaneseq
      %v303 = vshrl.u32 %v302, 7
      %v304 = vsub.s32 0, %v303
      %v305 = vrot.slane %v184, %v304
      %v306 = vmul.f32 %v305, %v284
      %v307 = vmul.f32 %v305, %v285
      %v308 = vlaneseq
      %v309 = vshrl.u32 %v308, 7
      %v310 = vsub.s32 0, %v309
      %v311 = vrot.slane %v294, %v310
      %v312 = vlaneseq
      %v313 = vshrl.u32 %v312, 7
      %v314 = vsub.s32 0, %v313
      %v315 = vrot.slane %v295, %v314
      %v316 = vlaneseq
      %v317 = vshrl.u32 %v316, 7
      %v318 = vsub.s32 0, %v317
      %v319 = vrot.slane %v296, %v318
      %v320 = vlaneseq
      %v321 = vshrl.u32 %v320, 7
      %v322 = vsub.s32 0, %v321
      %v323 = vrot.slane %v297, %v322
      %v324 = vlaneseq
      %v325 = vshrl.u32 %v324, 7
      %v326 = vsub.s32 0, %v325
      %v327 = vrot.slane %v298, %v326
      %v328 = vlaneseq
      %v329 = vshrl.u32 %v328, 7
      %v330 = vsub.s32 0, %v329
      %v331 = vrot.slane %v299, %v330
      %v332 = vlaneseq
      %v333 = vshrl.u32 %v332, 7
      %v334 = vsub.s32 0, %v333
      %v335 = vrot.slane %v300, %v334
      %v336 = vlaneseq
      %v337 = vshrl.u32 %v336, 7
      %v338 = vsub.s32 0, %v337
      %v339 = vrot.slane %v301, %v338
      %v340 = vsub.f32 %v311, %v306
      %v341 = vsub.f32 %v311, %v307
      %v342 = vsub.f32 %v315, %v306
      %v343 = vsub.f32 %v315, %v307
      %v344 = vsub.f32 %v319, %v306
      %v345 = vsub.f32 %v319, %v307
      %v346 = vsub.f32 %v323, %v306
      %v347 = vsub.f32 %v323, %v307
      %v348 = vsub.f32 %v327, %v306
      %v349 = vsub.f32 %v327, %v307
      %v350 = vsub.f32 %v331, %v306
      %v351 = vsub.f32 %v331, %v307
      %v352 = vsub.f32 %v335, %v306
      %v353 = vsub.f32 %v335, %v307
      %v354 = vsub.f32 %v339, %v306
      %v355 = vsub.f32 %v339, %v307
      %v356 = vmul.f32 %v186, %v265
      %v357 = vmul.f32 %v186, %v266
      %v358 = vmul.f32 %v186, %v267
      %v359 = vmul.f32 %v186, %v268
      %v360 = vmul.f32 %v186, %v269
      %v361 = vmul.f32 %v186, %v270
      %v362 = vmul.f32 %v186, %v271
      %v363 = vmul.f32 %v186, %v272
      %v364 = vadd.f32 %v356, %v201
      %v365 = vadd.f32 %v357, %v201
      %v366 = vadd.f32 %v358, %v201
      %v367 = vadd.f32 %v359, %v201
      %v368 = vadd.f32 %v360, %v201
      %v369 = vadd.f32 %v361, %v201
      %v370 = vadd.f32 %v362, %v201
      %v371 = vadd.f32 %v363, %v201
      %v372 = vlaneseq
      %v373 = vshrl.u32 %v372, 7
      %v374 = vsub.s32 0, %v373
      %v375 = vrot.slane %v188, %v374
      %v376 = vmul.f32 %v375, %v284
      %v377 = vmul.f32 %v375, %v285
      %v378 = vlaneseq
      %v379 = vshrl.u32 %v378, 7
      %v380 = vsub.s32 0, %v379
      %v381 = vrot.slane %v364, %v380
      %v382 = vlaneseq
      %v383 = vshrl.u32 %v382, 7
      %v384 = vsub.s32 0, %v383
      %v385 = vrot.slane %v365, %v384
      %v386 = vlaneseq
      %v387 = vshrl.u32 %v386, 7
      %v388 = vsub.s32 0, %v387
      %v389 = vrot.slane %v366, %v388
      %v390 = vlaneseq
      %v391 = vshrl.u32 %v390, 7
      %v392 = vsub.s32 0, %v391
      %v393 = vrot.slane %v367, %v392
      %v394 = vlaneseq
      %v395 = vshrl.u32 %v394, 7
      %v396 = vsub.s32 0, %v395
      %v397 = vrot.slane %v368, %v396
      %v398 = vlaneseq
      %v399 = vshrl.u32 %v398, 7
      %v400 = vsub.s32 0, %v399
      %v401 = vrot.slane %v369, %v400
      %v402 = vlaneseq
      %v403 = vshrl.u32 %v402, 7
      %v404 = vsub.s32 0, %v403
      %v405 = vrot.slane %v370, %v404
      %v406 = vlaneseq
      %v407 = vshrl.u32 %v406, 7
      %v408 = vsub.s32 0, %v407
      %v409 = vrot.slane %v371, %v408
      %v410 = vsub.f32 %v381, %v376
      %v411 = vsub.f32 %v381, %v377
      %v412 = vsub.f32 %v385, %v376
      %v413 = vsub.f32 %v385, %v377
      %v414 = vsub.f32 %v389, %v376
      %v415 = vsub.f32 %v389, %v377
      %v416 = vsub.f32 %v393, %v376
      %v417 = vsub.f32 %v393, %v377
      %v418 = vsub.f32 %v397, %v376
      %v419 = vsub.f32 %v397, %v377
      %v420 = vsub.f32 %v401, %v376
      %v421 = vsub.f32 %v401, %v377
      %v422 = vsub.f32 %v405, %v376
      %v423 = vsub.f32 %v405, %v377
      %v424 = vsub.f32 %v409, %v376
      %v425 = vsub.f32 %v409, %v377
      %v426 = vmul.f32 %v189, %v265
      %v427 = vmul.f32 %v189, %v266
      %v428 = vmul.f32 %v189, %v267
      %v429 = vmul.f32 %v189, %v268
      %v430 = vmul.f32 %v189, %v269
      %v431 = vmul.f32 %v189, %v270
      %v432 = vmul.f32 %v189, %v271
      %v433 = vmul.f32 %v189, %v272
      %v434 = vadd.f32 %v426, %v202
      %v435 = vadd.f32 %v427, %v202
      %v436 = vadd.f32 %v428, %v202
      %v437 = vadd.f32 %v429, %v202
      %v438 = vadd.f32 %v430, %v202
      %v439 = vadd.f32 %v431, %v202
      %v440 = vadd.f32 %v432, %v202
      %v441 = vadd.f32 %v433, %v202
      %v442 = vlaneseq
      %v443 = vshrl.u32 %v442, 7
      %v444 = vsub.s32 0, %v443
      %v445 = vrot.slane %v190, %v444
      %v446 = vmul.f32 %v445, %v284
      %v447 = vmul.f32 %v445, %v285
      %v448 = vlaneseq
      %v449 = vshrl.u32 %v448, 7
      %v450 = vsub.s32 0, %v449
      %v451 = vrot.slane %v434, %v450
      %v452 = vlaneseq
      %v453 = vshrl.u32 %v452, 7
      %v454 = vsub.s32 0, %v453
      %v455 = vrot.slane %v435, %v454
      %v456 = vlaneseq
      %v457 = vshrl.u32 %v456, 7
      %v458 = vsub.s32 0, %v457
      %v459 = vrot.slane %v436, %v458
      %v460 = vlaneseq
      %v461 = vshrl.u32 %v460, 7
      %v462 = vsub.s32 0, %v461
      %v463 = vrot.slane %v437, %v462
      %v464 = vlaneseq
      %v465 = vshrl.u32 %v464, 7
      %v466 = vsub.s32 0, %v465
      %v467 = vrot.slane %v438, %v466
      %v468 = vlaneseq
      %v469 = vshrl.u32 %v468, 7
      %v470 = vsub.s32 0, %v469
      %v471 = vrot.slane %v439, %v470
      %v472 = vlaneseq
      %v473 = vshrl.u32 %v472, 7
      %v474 = vsub.s32 0, %v473
      %v475 = vrot.slane %v440, %v474
      %v476 = vlaneseq
      %v477 = vshrl.u32 %v476, 7
      %v478 = vsub.s32 0, %v477
      %v479 = vrot.slane %v441, %v478
      %v480 = vsub.f32 %v451, %v446
      %v481 = vsub.f32 %v451, %v447
      %v482 = vsub.f32 %v455, %v446
      %v483 = vsub.f32 %v455, %v447
      %v484 = vsub.f32 %v459, %v446
      %v485 = vsub.f32 %v459, %v447
      %v486 = vsub.f32 %v463, %v446
      %v487 = vsub.f32 %v463, %v447
      %v488 = vsub.f32 %v467, %v446
      %v489 = vsub.f32 %v467, %v447
      %v490 = vsub.f32 %v471, %v446
      %v491 = vsub.f32 %v471, %v447
      %v492 = vsub.f32 %v475, %v446
      %v493 = vsub.f32 %v475, %v447
      %v494 = vsub.f32 %v479, %v446
      %v495 = vsub.f32 %v479, %v447
      %v496 = vmin.f32 %v410, %v480
      %v497 = vmin.f32 %v411, %v481
      %v498 = vmin.f32 %v412, %v482
      %v499 = vmin.f32 %v413, %v483
      %v500 = vmin.f32 %v414, %v484
      %v501 = vmin.f32 %v415, %v485
      %v502 = vmin.f32 %v416, %v486
      %v503 = vmin.f32 %v417, %v487
      %v504 = vmin.f32 %v418, %v488
      %v505 = vmin.f32 %v419, %v489
      %v506 = vmin.f32 %v420, %v490
      %v507 = vmin.f32 %v421, %v491
      %v508 = vmin.f32 %v422, %v492
      %v509 = vmin.f32 %v423, %v493
      %v510 = vmin.f32 %v424, %v494
      %v511 = vmin.f32 %v425, %v495
      %v512 = vmin.f32 %v340, %v496
      %v513 = vmin.f32 %v341, %v497
      %v514 = vmin.f32 %v342, %v498
      %v515 = vmin.f32 %v343, %v499
      %v516 = vmin.f32 %v344, %v500
      %v517 = vmin.f32 %v345, %v501
      %v518 = vmin.f32 %v346, %v502
      %v519 = vmin.f32 %v347, %v503
      %v520 = vmin.f32 %v348, %v504
      %v521 = vmin.f32 %v349, %v505
      %v522 = vmin.f32 %v350, %v506
      %v523 = vmin.f32 %v351, %v507
      %v524 = vmin.f32 %v352, %v508
      %v525 = vmin.f32 %v353, %v509
      %v526 = vmin.f32 %v354, %v510
      %v527 = vmin.f32 %v355, %v511
      %v528 = vmul.f32 %v212, %v265
      %v529 = vmul.f32 %v212, %v266
      %v530 = vmul.f32 %v212, %v267
      %v531 = vmul.f32 %v212, %v268
      %v532 = vmul.f32 %v212, %v269
      %v533 = vmul.f32 %v212, %v270
      %v534 = vmul.f32 %v212, %v271
      %v535 = vmul.f32 %v212, %v272
      %v536 = vadd.f32 %v528, %v222
      %v537 = vadd.f32 %v529, %v222
      %v538 = vadd.f32 %v530, %v222
      %v539 = vadd.f32 %v531, %v222
      %v540 = vadd.f32 %v532, %v222
      %v541 = vadd.f32 %v533, %v222
      %v542 = vadd.f32 %v534, %v222
      %v543 = vadd.f32 %v535, %v222
      %v544 = vlaneseq
      %v545 = vshrl.u32 %v544, 7
      %v546 = vsub.s32 0, %v545
      %v547 = vrot.slane %v217, %v546
      %v548 = vmul.f32 %v547, %v284
      %v549 = vmul.f32 %v547, %v285
      %v550 = vlaneseq
      %v551 = vshrl.u32 %v550, 7
      %v552 = vsub.s32 0, %v551
      %v553 = vrot.slane %v536, %v552
      %v554 = vlaneseq
      %v555 = vshrl.u32 %v554, 7
      %v556 = vsub.s32 0, %v555
      %v557 = vrot.slane %v537, %v556
      %v558 = vlaneseq
      %v559 = vshrl.u32 %v558, 7
      %v560 = vsub.s32 0, %v559
      %v561 = vrot.slane %v538, %v560
      %v562 = vlaneseq
      %v563 = vshrl.u32 %v562, 7
      %v564 = vsub.s32 0, %v563
      %v565 = vrot.slane %v539, %v564
      %v566 = vlaneseq
      %v567 = vshrl.u32 %v566, 7
      %v568 = vsub.s32 0, %v567
      %v569 = vrot.slane %v540, %v568
      %v570 = vlaneseq
      %v571 = vshrl.u32 %v570, 7
      %v572 = vsub.s32 0, %v571
      %v573 = vrot.slane %v541, %v572
      %v574 = vlaneseq
      %v575 = vshrl.u32 %v574, 7
      %v576 = vsub.s32 0, %v575
      %v577 = vrot.slane %v542, %v576
      %v578 = vlaneseq
      %v579 = vshrl.u32 %v578, 7
      %v580 = vsub.s32 0, %v579
      %v581 = vrot.slane %v543, %v580
      %v582 = vsub.f32 %v553, %v548
      %v583 = vsub.f32 %v553, %v549
      %v584 = vsub.f32 %v557, %v548
      %v585 = vsub.f32 %v557, %v549
      %v586 = vsub.f32 %v561, %v548
      %v587 = vsub.f32 %v561, %v549
      %v588 = vsub.f32 %v565, %v548
      %v589 = vsub.f32 %v565, %v549
      %v590 = vsub.f32 %v569, %v548
      %v591 = vsub.f32 %v569, %v549
      %v592 = vsub.f32 %v573, %v548
      %v593 = vsub.f32 %v573, %v549
      %v594 = vsub.f32 %v577, %v548
      %v595 = vsub.f32 %v577, %v549
      %v596 = vsub.f32 %v581, %v548
      %v597 = vsub.f32 %v581, %v549
      %vm598 = vcmp.ge.f32.partialorder %v582, 0.0
      %vm599 = vcmp.ge.f32.partialorder %v583, 0.0
      %vm600 = vcmp.ge.f32.partialorder %v584, 0.0
      %vm601 = vcmp.ge.f32.partialorder %v585, 0.0
      %vm602 = vcmp.ge.f32.partialorder %v586, 0.0
      %vm603 = vcmp.ge.f32.partialorder %v587, 0.0
      %vm604 = vcmp.ge.f32.partialorder %v588, 0.0
      %vm605 = vcmp.ge.f32.partialorder %v589, 0.0
      %vm606 = vcmp.ge.f32.partialorder %v590, 0.0
      %vm607 = vcmp.ge.f32.partialorder %v591, 0.0
      %vm608 = vcmp.ge.f32.partialorder %v592, 0.0
      %vm609 = vcmp.ge.f32.partialorder %v593, 0.0
      %vm610 = vcmp.ge.f32.partialorder %v594, 0.0
      %vm611 = vcmp.ge.f32.partialorder %v595, 0.0
      %vm612 = vcmp.ge.f32.partialorder %v596, 0.0
      %vm613 = vcmp.ge.f32.partialorder %v597, 0.0
      %v614 = vmax.f32 %v582, 1e-10
      %v615 = vmax.f32 %v583, 1e-10
      %v616 = vmax.f32 %v584, 1e-10
      %v617 = vmax.f32 %v585, 1e-10
      %v618 = vmax.f32 %v586, 1e-10
      %v619 = vmax.f32 %v587, 1e-10
      %v620 = vmax.f32 %v588, 1e-10
      %v621 = vmax.f32 %v589, 1e-10
      %v622 = vmax.f32 %v590, 1e-10
      %v623 = vmax.f32 %v591, 1e-10
      %v624 = vmax.f32 %v592, 1e-10
      %v625 = vmax.f32 %v593, 1e-10
      %v626 = vmax.f32 %v594, 1e-10
      %v627 = vmax.f32 %v595, 1e-10
      %v628 = vmax.f32 %v596, 1e-10
      %v629 = vmax.f32 %v597, 1e-10
      %v630 = vmin.f32 %v582, -1e-10
      %v631 = vmin.f32 %v583, -1e-10
      %v632 = vmin.f32 %v584, -1e-10
      %v633 = vmin.f32 %v585, -1e-10
      %v634 = vmin.f32 %v586, -1e-10
      %v635 = vmin.f32 %v587, -1e-10
      %v636 = vmin.f32 %v588, -1e-10
      %v637 = vmin.f32 %v589, -1e-10
      %v638 = vmin.f32 %v590, -1e-10
      %v639 = vmin.f32 %v591, -1e-10
      %v640 = vmin.f32 %v592, -1e-10
      %v641 = vmin.f32 %v593, -1e-10
      %v642 = vmin.f32 %v594, -1e-10
      %v643 = vmin.f32 %v595, -1e-10
      %v644 = vmin.f32 %v596, -1e-10
      %v645 = vmin.f32 %v597, -1e-10
      %v646 = vsel %vm598, %v614, %v630
      %v647 = vsel %vm599, %v615, %v631
      %v648 = vsel %vm600, %v616, %v632
      %v649 = vsel %vm601, %v617, %v633
      %v650 = vsel %vm602, %v618, %v634
      %v651 = vsel %vm603, %v619, %v635
      %v652 = vsel %vm604, %v620, %v636
      %v653 = vsel %vm605, %v621, %v637
      %v654 = vsel %vm606, %v622, %v638
      %v655 = vsel %vm607, %v623, %v639
      %v656 = vsel %vm608, %v624, %v640
      %v657 = vsel %vm609, %v625, %v641
      %v658 = vsel %vm610, %v626, %v642
      %v659 = vsel %vm611, %v627, %v643
      %v660 = vsel %vm612, %v628, %v644
      %v661 = vsel %vm613, %v629, %v645
      %v662 = vrcp.pop %v646
      %v663 = vrcp.pop %v647
      %v664 = vrcp.pop %v648
      %v665 = vrcp.pop %v649
      %v666 = vrcp.pop %v650
      %v667 = vrcp.pop %v651
      %v668 = vrcp.pop %v652
      %v669 = vrcp.pop %v653
      %v670 = vrcp.pop %v654
      %v671 = vrcp.pop %v655
      %v672 = vrcp.pop %v656
      %v673 = vrcp.pop %v657
      %v674 = vrcp.pop %v658
      %v675 = vrcp.pop %v659
      %v676 = vrcp.pop %v660
      %v677 = vrcp.pop %v661
      %v678 = vlaneseq
      %v679 = vshrl.u32 %v678, 7
      %v680 = vsub.s32 0, %v679
      %v681 = vrot.slane %v207, %v680
      %v682 = vmul.f32 %v681, %v662
      %v683 = vmul.f32 %v681, %v663
      %v684 = vmul.f32 %v681, %v664
      %v685 = vmul.f32 %v681, %v665
      %v686 = vmul.f32 %v681, %v666
      %v687 = vmul.f32 %v681, %v667
      %v688 = vmul.f32 %v681, %v668
      %v689 = vmul.f32 %v681, %v669
      %v690 = vmul.f32 %v681, %v670
      %v691 = vmul.f32 %v681, %v671
      %v692 = vmul.f32 %v681, %v672
      %v693 = vmul.f32 %v681, %v673
      %v694 = vmul.f32 %v681, %v674
      %v695 = vmul.f32 %v681, %v675
      %v696 = vmul.f32 %v681, %v676
      %v697 = vmul.f32 %v681, %v677
      %v698 = vmin.f32 %v512, %v682
      %v699 = vmin.f32 %v513, %v683
      %v700 = vmin.f32 %v514, %v684
      %v701 = vmin.f32 %v515, %v685
      %v702 = vmin.f32 %v516, %v686
      %v703 = vmin.f32 %v517, %v687
      %v704 = vmin.f32 %v518, %v688
      %v705 = vmin.f32 %v519, %v689
      %v706 = vmin.f32 %v520, %v690
      %v707 = vmin.f32 %v521, %v691
      %v708 = vmin.f32 %v522, %v692
      %v709 = vmin.f32 %v523, %v693
      %v710 = vmin.f32 %v524, %v694
      %v711 = vmin.f32 %v525, %v695
      %v712 = vmin.f32 %v526, %v696
      %v713 = vmin.f32 %v527, %v697
      %vm714 = vcmp.ge.f32.partialorder %v698, 0.0
      %vm715 = vcmp.ge.f32.partialorder %v699, 0.0
      %vm716 = vcmp.ge.f32.partialorder %v700, 0.0
      %vm717 = vcmp.ge.f32.partialorder %v701, 0.0
      %vm718 = vcmp.ge.f32.partialorder %v702, 0.0
      %vm719 = vcmp.ge.f32.partialorder %v703, 0.0
      %vm720 = vcmp.ge.f32.partialorder %v704, 0.0
      %vm721 = vcmp.ge.f32.partialorder %v705, 0.0
      %vm722 = vcmp.ge.f32.partialorder %v706, 0.0
      %vm723 = vcmp.ge.f32.partialorder %v707, 0.0
      %vm724 = vcmp.ge.f32.partialorder %v708, 0.0
      %vm725 = vcmp.ge.f32.partialorder %v709, 0.0
      %vm726 = vcmp.ge.f32.partialorder %v710, 0.0
      %vm727 = vcmp.ge.f32.partialorder %v711, 0.0
      %vm728 = vcmp.ge.f32.partialorder %v712, 0.0
      %vm729 = vcmp.ge.f32.partialorder %v713, 0.0
      %v730 = vsel %vm714, %v682, 1e+30
      %v731 = vsel %vm715, %v683, 1e+30
      %v732 = vsel %vm716, %v684, 1e+30
      %v733 = vsel %vm717, %v685, 1e+30
      %v734 = vsel %vm718, %v686, 1e+30
      %v735 = vsel %vm719, %v687, 1e+30
      %v736 = vsel %vm720, %v688, 1e+30
      %v737 = vsel %vm721, %v689, 1e+30
      %v738 = vsel %vm722, %v690, 1e+30
      %v739 = vsel %vm723, %v691, 1e+30
      %v740 = vsel %vm724, %v692, 1e+30
      %v741 = vsel %vm725, %v693, 1e+30
      %v742 = vsel %vm726, %v694, 1e+30
      %v743 = vsel %vm727, %v695, 1e+30
      %v744 = vsel %vm728, %v696, 1e+30
      %v745 = vsel %vm729, %v697, 1e+30
      %746 = vmin.xlane.f32.xlu0 %v730
      %v747 = vpop.xlane.xlu0 %746
      %748 = vmin.xlane.f32.xlu0 %v731
      %v749 = vpop.xlane.xlu0 %748
      %750 = vmin.xlane.f32.xlu0 %v732
      %v751 = vpop.xlane.xlu0 %750
      %752 = vmin.xlane.f32.xlu0 %v733
      %v753 = vpop.xlane.xlu0 %752
      %754 = vmin.xlane.f32.xlu0 %v734
      %v755 = vpop.xlane.xlu0 %754
      %756 = vmin.xlane.f32.xlu0 %v735
      %v757 = vpop.xlane.xlu0 %756
      %758 = vmin.xlane.f32.xlu0 %v736
      %v759 = vpop.xlane.xlu0 %758
      %760 = vmin.xlane.f32.xlu0 %v737
      %v761 = vpop.xlane.xlu0 %760
      %762 = vmin.xlane.f32.xlu0 %v738
      %v763 = vpop.xlane.xlu0 %762
      %764 = vmin.xlane.f32.xlu0 %v739
      %v765 = vpop.xlane.xlu0 %764
      %766 = vmin.xlane.f32.xlu0 %v740
      %v767 = vpop.xlane.xlu0 %766
      %768 = vmin.xlane.f32.xlu0 %v741
      %v769 = vpop.xlane.xlu0 %768
      %770 = vmin.xlane.f32.xlu0 %v742
      %v771 = vpop.xlane.xlu0 %770
      %772 = vmin.xlane.f32.xlu0 %v743
      %v773 = vpop.xlane.xlu0 %772
      %774 = vmin.xlane.f32.xlu0 %v744
      %v775 = vpop.xlane.xlu0 %774
      %776 = vmin.xlane.f32.xlu0 %v745
      %v777 = vpop.xlane.xlu0 %776
      %v778 = vld [vmem:[%s154] sm:$0xff]
      %v795 = vlaneseq
      %v796 = vand.u32 %v795, 127
      %v797 = vlaneseq
      %v798 = vshrl.u32 %v797, 7
      %v799 = vsub.s32 %v796, %v798
      %v800 = vrot.slane %v747, %v799
      %v801 = vadd.s32 %v796, 4294967288
      %v802 = vlaneseq
      %v803 = vshrl.u32 %v802, 7
      %v804 = vsub.s32 %v801, %v803
      %v805 = vrot.slane %v749, %v804
      %vm806 = vcmask 130112
      %v807 = vsel %vm806, %v805, %v800
      %v808 = vlaneseq
      %v809 = vshrl.u32 %v808, 7
      %v810 = vsub.s32 %v796, %v809
      %v811 = vrot.slane %v751, %v810
      %v812 = vlaneseq
      %v813 = vshrl.u32 %v812, 7
      %v814 = vsub.s32 %v801, %v813
      %v815 = vrot.slane %v753, %v814
      %v816 = vsel %vm806, %v815, %v811
      %v817 = vlaneseq
      %v818 = vshrl.u32 %v817, 7
      %v819 = vsub.s32 %v796, %v818
      %v820 = vrot.slane %v755, %v819
      %v821 = vlaneseq
      %v822 = vshrl.u32 %v821, 7
      %v823 = vsub.s32 %v801, %v822
      %v824 = vrot.slane %v757, %v823
      %v825 = vsel %vm806, %v824, %v820
      %v826 = vlaneseq
      %v827 = vshrl.u32 %v826, 7
      %v828 = vsub.s32 %v796, %v827
      %v829 = vrot.slane %v759, %v828
      %v830 = vlaneseq
      %v831 = vshrl.u32 %v830, 7
      %v832 = vsub.s32 %v801, %v831
      %v833 = vrot.slane %v761, %v832
      %v834 = vsel %vm806, %v833, %v829
      %v835 = vlaneseq
      %v836 = vshrl.u32 %v835, 7
      %v837 = vsub.s32 %v796, %v836
      %v838 = vrot.slane %v763, %v837
      %v839 = vlaneseq
      %v840 = vshrl.u32 %v839, 7
      %v841 = vsub.s32 %v801, %v840
      %v842 = vrot.slane %v765, %v841
      %v843 = vsel %vm806, %v842, %v838
      %v844 = vlaneseq
      %v845 = vshrl.u32 %v844, 7
      %v846 = vsub.s32 %v796, %v845
      %v847 = vrot.slane %v767, %v846
      %v848 = vlaneseq
      %v849 = vshrl.u32 %v848, 7
      %v850 = vsub.s32 %v801, %v849
      %v851 = vrot.slane %v769, %v850
      %v852 = vsel %vm806, %v851, %v847
      %v853 = vlaneseq
      %v854 = vshrl.u32 %v853, 7
      %v855 = vsub.s32 %v796, %v854
      %v856 = vrot.slane %v771, %v855
      %v857 = vlaneseq
      %v858 = vshrl.u32 %v857, 7
      %v859 = vsub.s32 %v801, %v858
      %v860 = vrot.slane %v773, %v859
      %v861 = vsel %vm806, %v860, %v856
      %v862 = vlaneseq
      %v863 = vshrl.u32 %v862, 7
      %v864 = vsub.s32 %v796, %v863
      %v865 = vrot.slane %v775, %v864
      %v866 = vlaneseq
      %v867 = vshrl.u32 %v866, 7
      %v868 = vsub.s32 %v801, %v867
      %v869 = vrot.slane %v777, %v868
      %v870 = vsel %vm806, %v869, %v865
      %vm871 = vcmask 1041409
      %v872 = vsel %vm871, %v816, %v807
      %vm873 = vcmask 1042434
      %v874 = vsel %vm873, %v825, %v872
      %vm875 = vcmask 1043459
      %v876 = vsel %vm875, %v834, %v874
      %vm877 = vcmask 1044484
      %v878 = vsel %vm877, %v843, %v876
      %vm879 = vcmask 1045509
      %v880 = vsel %vm879, %v852, %v878
      %vm881 = vcmask 1046534
      %v882 = vsel %vm881, %v861, %v880
      %vm883 = vcmask 1047559
      %v884 = vsel %vm883, %v870, %v882
      %v886 = vmin.f32 %v778, %v884
      %vm887 = vcmask 130048
      %888 = vst.msk [vmem:[%s154] sm:$0xff] %vm887, %v886
      // Predicated region
      $region29: #{depth_renderer_forward.3} parent=23 // pred_check
        %p889 = pneg %p155
      $region30: #{depth_renderer_forward.3} parent=23 // pred_check_branch
        %891 = sbr.rel (%p889) target = $region32
      $region31: #{depth_renderer_forward.3} parent=23 // pred_region
        %v892 = vld [vmem:[%s154] sm:$0xff]
        %vm893 = vcmp.ge.f32.partialorder %v892, 1e+29
        %v894 = vsel %vm893, -1.0, %v892
        %895 = vst.msk [vmem:[%s154] sm:$0xff] %vm887, %v894
      $region32: #{depth_renderer_forward.3} parent=23 // pred_fallthru
        _
      %p896 = scmp.lt.s32.totalorder %s17, 1
      %s897 = scalar_select %p896, %s17, 1
      %p898 = scmp.lt.s32.totalorder %s18, 1
      %s899 = scalar_select %p898, %s18, 1
      %s900 = smul.addr %s897, 2
      %s901 = sadd.s32 %s899, %s900
      %s902 = smul.addr %s901, 8
      %s903 = scalar_lea.vmem %s1, %s902
      // Predicated region
      $region33: #{depth_renderer_forward.3} parent=23 // pred_check
        %p904 = pneg %p79
      $region34: #{depth_renderer_forward.3} parent=23 // pred_check_branch
        %906 = sbr.rel (%p904) target = $region36
      $region35: #{depth_renderer_forward.3} parent=23 // pred_region
        _
      $region36: #{depth_renderer_forward.3} parent=23 // pred_fallthru
        _
    $region24: #{depth_renderer_forward.3} parent=5 // pred_fallthru
      _
    %p907 = scmp.le.s32.totalorder 2, %s7
    // Predicated region
    $region37: #{depth_renderer_forward.3} parent=5 // pred_check
      %p908 = pneg %p907
    $region38: #{depth_renderer_forward.3} parent=5 // pred_check_branch
      %910 = sbr.rel (%p908) target = $region40
    $region39: #{depth_renderer_forward.3} parent=5 // pred_region
      %s911 = ssub.s32 %s7, 2
      // Predicated region
      $region41: #{depth_renderer_forward.3} parent=39 // pred_check
        %p912 = pneg %p85
      $region42: #{depth_renderer_forward.3} parent=39 // pred_check_branch
        %914 = sbr.rel (%p912) target = $region44
      $region43: #{depth_renderer_forward.3} parent=39 // pred_region
        %p915 = scmp.lt.s32.totalorder %s20, 1
        %s916 = scalar_select %p915, %s20, 1
        %p917 = scmp.lt.s32.totalorder %s21, 1
        %s918 = scalar_select %p917, %s21, 1
        %s919 = smul.addr %s916, 2
        %s920 = sadd.s32 %s918, %s919
        %s921 = smul.addr %s920, 8
        %s922 = scalar_lea.vmem %s1, %s921
      $region44: #{depth_renderer_forward.3} parent=39 // pred_fallthru
        _
    $region40: #{depth_renderer_forward.3} parent=5 // pred_fallthru
      _
  $region6: #{depth_renderer_forward.3} parent=0 // loop_footer
    %s11 = sadd.s32 1, %s7
  $region7: #{depth_renderer_forward.3} parent=0 // loop_footer_branch
    %6 = sbr.rel target = $region3
  $region8: #{depth_renderer_forward.3} parent=0 // loop_exit
    _

</llo_original>
